<compile_context>
chip_gen: v6e
topology: v6e:2x2x1
jax: 0.10.0
libtpu: 0.0.40
codegen_flags: <defaults>
</compile_context>

<pallas_src>
import functools
import math

import jax
import jax.numpy as jnp
from jax.experimental import pallas as pl
from jax.experimental.pallas import tpu as pltpu


def _layer_norm(x, gamma, beta, eps=1e-5):
    # x: (rows, D) f32, gamma/beta: (1, D) f32
    mu = jnp.mean(x, axis=-1, keepdims=True)
    var = jnp.mean(jnp.square(x - mu), axis=-1, keepdims=True)
    return (x - mu) * jax.lax.rsqrt(var + eps) * gamma + beta


def _block_kernel(n_head, seq_real,
                  x_ref,                      # (1, tq, D)   input tile (f32)
                  kT_ref, v_ref,              # (1, D, Spad), (1, Spad, D) bf16
                  ln1_g_ref, ln1_b_ref,       # (1, D) f32
                  wq_ref, bq_ref,             # (D, D) bf16 (scale folded), (1, D) f32
                  wo_ref, bo_ref,             # (D, D) bf16 input-major, (1, D) f32
                  ln2_g_ref, ln2_b_ref,       # (1, D) f32
                  wfc_ref, bfc_ref,           # (D, 4D) bf16, (1, 4D) f32
                  wpj_ref, bpj_ref,           # (4D, D) bf16, (1, D) f32
                  o_ref,                      # (1, tq, D)   output tile
                  attn_ref):                  # (tq, D) bf16 scratch (head outputs)
    D = x_ref.shape[2]
    s_pad = kT_ref.shape[2]
    dh = D // n_head

    x = x_ref[0].astype(jnp.float32)                             # (tq, D)

    # ---- attention branch: Q projection for this tile (K/V precomputed) ----
    h1 = _layer_norm(x, ln1_g_ref[...], ln1_b_ref[...])
    # 1/sqrt(dh) is folded into wq/bq on the host.
    q = jnp.dot(h1.astype(jnp.bfloat16), wq_ref[...],
                preferred_element_type=jnp.float32) + bq_ref[...]
    q_bf = q.astype(jnp.bfloat16)                                # (tq, D)

    kT = kT_ref[0]                                               # (D, Spad) bf16
    v = v_ref[0]                                                 # (Spad, D) bf16

    # hoisted key-padding mask (padded key columns -> large negative score)
    kmask = None
    if s_pad != seq_real:
        kmask = jax.lax.broadcasted_iota(jnp.int32, (1, s_pad), 1) < seq_real

    for hh in range(n_head):                 # static loop, static lane offsets
        lo = hh * dh
        s = jnp.dot(q_bf[:, lo:lo + dh], kT[lo:lo + dh, :],
                    preferred_element_type=jnp.float32)          # (tq, Spad)
        if kmask is not None:
            s = jnp.where(kmask, s, jnp.float32(-1e30))
        s_max = jnp.max(s, axis=-1, keepdims=True)
        e = jnp.exp(s - s_max)
        # approx reciprocal runs on the EUP slot (off the VPU critical path)
        prob = e * pl.reciprocal(jnp.sum(e, axis=-1, keepdims=True), approx=True)
        o_h = jnp.dot(prob.astype(jnp.bfloat16), v[:, lo:lo + dh],
                      preferred_element_type=jnp.float32)        # (tq, dh)
        attn_ref[:, lo:lo + dh] = o_h.astype(jnp.bfloat16)

    # one full-depth out_proj matmul (K = D) instead of n_head K=dh matmuls
    attn = jnp.dot(attn_ref[...], wo_ref[...],
                   preferred_element_type=jnp.float32) + bo_ref[...]
    x = x + attn

    # ---- MLP branch ----
    h2 = _layer_norm(x, ln2_g_ref[...], ln2_b_ref[...])
    a = jnp.dot(h2.astype(jnp.bfloat16), wfc_ref[...],
                preferred_element_type=jnp.float32) + bfc_ref[...]
    a = a * jax.nn.sigmoid(1.702 * a)                            # QuickGELU (f32)
    m = jnp.dot(a.astype(jnp.bfloat16), wpj_ref[...],
                preferred_element_type=jnp.float32) + bpj_ref[...]
    o_ref[0] = (x + m).astype(o_ref.dtype)


def _pick_tq(S):
    for cand in (256, 128, 64, 32, 16, 8):
        if cand <= S and S % cand == 0:
            return cand
    return S  # fallback: one tile covering the whole sequence


def _vmem_cap_bytes():
    try:
        return int(pltpu.get_tpu_info().vmem_capacity_bytes)
    except Exception:
        return 64 * 2 ** 20   # conservative (v7x per-TC VMEM)


def residual_attention_block(x_sbd, params, n_head):
    """x_sbd: (S, B, D) float32 (seq-first, like nn.MultiheadAttention)."""
    S, B, D = x_sbd.shape
    assert D % n_head == 0
    dh = D // n_head
    scale = 1.0 / math.sqrt(dh)

    # TODO(synk): the (S,B,D)<->(B,S,D) transposes could be dropped if the
    # surrounding model supplied batch-first activations.
    x_bsd = jnp.transpose(x_sbd, (1, 0, 2)).astype(jnp.float32)  # (B, S, D)

    p = params
    # Host-side layout plumbing: contraction-major bf16 weights (f32 accum on
    # the MXU), with the attention scale folded into the Q projection.
    wqkv = p['wqkv']                                             # (3D, D) torch layout
    wq_t = (jnp.transpose(wqkv[:D, :]) * scale).astype(jnp.bfloat16)     # (D, D)
    bq = p['bqkv'][:, :D] * scale                                # (1, D) f32
    wk_t = jnp.transpose(wqkv[D:2 * D, :])                       # (D, D) f32
    wv_t = jnp.transpose(wqkv[2 * D:, :])                        # (D, D) f32
    bk = p['bqkv'][:, D:2 * D]
    bv = p['bqkv'][:, 2 * D:]
    wo_t = jnp.transpose(p['wo']).astype(jnp.bfloat16)           # (D, D) input-major
    wfc_t = jnp.transpose(p['wfc']).astype(jnp.bfloat16)         # (D, 4D)
    wpj_t = jnp.transpose(p['wpj']).astype(jnp.bfloat16)         # (4D, D)

    # ---- LN1 + K/V projection hoisted out of the kernel (plain XLA) ----
    mu = jnp.mean(x_bsd, axis=-1, keepdims=True)
    var = jnp.mean(jnp.square(x_bsd - mu), axis=-1, keepdims=True)
    h1 = (x_bsd - mu) * jax.lax.rsqrt(var + 1e-5) * p['ln1_g'] + p['ln1_b']
    k = jnp.einsum('bsd,de->bse', h1, wk_t) + bk                 # (B, S, D) f32
    v = jnp.einsum('bsd,de->bse', h1, wv_t) + bv                 # (B, S, D) f32

    # pad the key axis to a lane-dense multiple of 128; masked in-kernel
    s_pad = ((S + 127) // 128) * 128
    pad = s_pad - S
    kT = jnp.swapaxes(k, 1, 2)                                   # (B, D, S)
    if pad:
        kT = jnp.pad(kT, ((0, 0), (0, 0), (0, pad)))
        v = jnp.pad(v, ((0, 0), (0, pad), (0, 0)))
    kT = kT.astype(jnp.bfloat16)                                 # (B, D, Spad)
    v_bf = v.astype(jnp.bfloat16)                                # (B, Spad, D)

    tq = _pick_tq(S)
    grid = (B, S // tq)

    def const_spec(arr):
        nd = arr.ndim
        idx = lambda b, qi, _nd=nd: (0,) * _nd
        try:
            # constant across the whole grid -> a single VMEM buffer suffices
            return pl.BlockSpec(arr.shape, idx, pipeline_mode=pl.Buffered(1))
        except Exception:
            return pl.BlockSpec(arr.shape, idx)

    in_specs = [
        pl.BlockSpec((1, tq, D), lambda b, qi: (b, qi, 0)),       # x tile
        pl.BlockSpec((1, D, s_pad), lambda b, qi: (b, 0, 0)),     # K^T per batch
        pl.BlockSpec((1, s_pad, D), lambda b, qi: (b, 0, 0)),     # V   per batch
        const_spec(p['ln1_g']), const_spec(p['ln1_b']),
        const_spec(wq_t), const_spec(bq),
        const_spec(wo_t), const_spec(p['bo']),
        const_spec(p['ln2_g']), const_spec(p['ln2_b']),
        const_spec(wfc_t), const_spec(p['bfc']),
        const_spec(wpj_t), const_spec(p['bpj']),
    ]

    # ---- honest VMEM budget, capped by the actual chip capacity ----
    def nbytes(a):
        return int(a.size) * jnp.dtype(a.dtype).itemsize

    weight_bytes = sum(nbytes(a) for a in (wq_t, wo_t, wfc_t, wpj_t))  # single-buffered
    bias_bytes = sum(nbytes(a) for a in
                     (p['ln1_g'], p['ln1_b'], bq, p['bo'], p['ln2_g'],
                      p['ln2_b'], p['bfc'], p['bpj']))
    kv_bytes = 2 * (D * s_pad * 2 + s_pad * D * 2)               # kT+V, double-buffered
    io_bytes = 2 * (tq * D * 4) * 2                              # x tile + out tile
    scratch_bytes = tq * D * 2                                   # attn scratch (bf16)
    inter_bytes = 4 * (tq * 4 * D + 3 * tq * s_pad + 6 * tq * D) # live f32 temporaries
    est = (weight_bytes + bias_bytes + kv_bytes + io_bytes
           + scratch_bytes + inter_bytes)
    cap = _vmem_cap_bytes()
    vmem_limit = int(min(max(int(est * 1.25), 16 * 2 ** 20), cap - 16 * 2 ** 20))

    out = pl.pallas_call(
        functools.partial(_block_kernel, n_head, S),
        out_shape=jax.ShapeDtypeStruct((B, S, D), x_sbd.dtype),
        grid_spec=pltpu.PrefetchScalarGridSpec(
            num_scalar_prefetch=0,
            grid=grid,
            in_specs=in_specs,
            out_specs=pl.BlockSpec((1, tq, D), lambda b, qi: (b, qi, 0)),
            scratch_shapes=[pltpu.VMEM((tq, D), jnp.bfloat16)],
        ),
        compiler_params=pltpu.CompilerParams(
            dimension_semantics=("parallel", "parallel"),
            vmem_limit_bytes=vmem_limit),
    )(x_bsd, kT, v_bf,
      p['ln1_g'], p['ln1_b'],
      wq_t, bq,
      wo_t, p['bo'],
      p['ln2_g'], p['ln2_b'],
      wfc_t, p['bfc'],
      wpj_t, p['bpj'])

    return jnp.transpose(out, (1, 0, 2))                         # back to (S, B, D)


def init_params(key, d_model):
    ks = jax.random.split(key, 6)
    s = 0.02
    return {
        'ln1_g': jnp.ones((1, d_model), jnp.float32),
        'ln1_b': jnp.zeros((1, d_model), jnp.float32),
        'wqkv': s * jax.random.normal(ks[0], (3 * d_model, d_model), jnp.float32),
        'bqkv': s * jax.random.normal(ks[1], (1, 3 * d_model), jnp.float32),
        'wo': s * jax.random.normal(ks[2], (d_model, d_model), jnp.float32),
        'bo': jnp.zeros((1, d_model), jnp.float32),
        'ln2_g': jnp.ones((1, d_model), jnp.float32),
        'ln2_b': jnp.zeros((1, d_model), jnp.float32),
        'wfc': s * jax.random.normal(ks[3], (4 * d_model, d_model), jnp.float32),
        'bfc': s * jax.random.normal(ks[4], (1, 4 * d_model), jnp.float32),
        'wpj': s * jax.random.normal(ks[5], (d_model, 4 * d_model), jnp.float32),
        'bpj': jnp.zeros((1, d_model), jnp.float32),
    }


def reference_block(x_sbd, p, n_head):
    """Plain-JAX f32 reference mirroring the PyTorch forward (no masks)."""
    S, B, D = x_sbd.shape
    dh = D // n_head

    def ln(x, g, b):
        mu = jnp.mean(x, -1, keepdims=True)
        var = jnp.mean(jnp.square(x - mu), -1, keepdims=True)
        return (x - mu) * jax.lax.rsqrt(var + 1e-5) * g + b

    x = jnp.transpose(x_sbd, (1, 0, 2))  # (B, S, D)
    h = ln(x, p['ln1_g'], p['ln1_b'])
    qkv = jnp.einsum('bsd,ed->bse', h, p['wqkv']) + p['bqkv']
    q, k, v = jnp.split(qkv, 3, axis=-1)
    q = q.reshape(B, S, n_head, dh).transpose(0, 2, 1, 3) / (dh ** 0.5)
    k = k.reshape(B, S, n_head, dh).transpose(0, 2, 1, 3)
    v = v.reshape(B, S, n_head, dh).transpose(0, 2, 1, 3)
    sc = jnp.einsum('bhqd,bhkd->bhqk', q, k)
    pr = jax.nn.softmax(sc, axis=-1)
    o = jnp.einsum('bhqk,bhkd->bhqd', pr, v).transpose(0, 2, 1, 3).reshape(B, S, D)
    o = jnp.einsum('bsd,ed->bse', o, p['wo']) + p['bo']
    x = x + o
    h2 = ln(x, p['ln2_g'], p['ln2_b'])
    a = jnp.einsum('bsd,ed->bse', h2, p['wfc']) + p['bfc']
    a = a * jax.nn.sigmoid(1.702 * a)
    m = jnp.einsum('bsd,ed->bse', a, p['wpj']) + p['bpj']
    x = x + m
    return jnp.transpose(x, (1, 0, 2))


if __name__ == "__main__":
    S, B, D, H = 8, 2, 32, 4   # seq, batch, d_model, n_head
    key = jax.random.PRNGKey(0)
    kx, kp = jax.random.split(key)
    x = jax.random.normal(kx, (S, B, D), jnp.float32)
    params = init_params(kp, D)

    out = residual_attention_block(x, params, H)
    out = jax.block_until_ready(out)

    ref = reference_block(x, params, H)
    assert out.shape == (S, B, D)
    max_err = float(jnp.max(jnp.abs(out - ref)))
    # bf16 matmul operands (f32 accumulation) => compare at a widened tolerance.
    assert jnp.allclose(out, ref, atol=2e-2, rtol=2e-2), max_err

    print("KERNEL_OK")
</pallas_src>

<mosaic_0001>
module attributes {stable_mosaic.version = 11 : i64} {
  func.func @_block_kernel(%arg0: i32, %arg1: i32, %arg2: memref<1x8x32xf32, #tpu.memory_space<vmem>>, %arg3: memref<1x32x128xbf16, #tpu.memory_space<vmem>>, %arg4: memref<1x128x32xbf16, #tpu.memory_space<vmem>>, %arg5: memref<1x32xf32, #tpu.memory_space<vmem>>, %arg6: memref<1x32xf32, #tpu.memory_space<vmem>>, %arg7: memref<32x32xbf16, #tpu.memory_space<vmem>>, %arg8: memref<1x32xf32, #tpu.memory_space<vmem>>, %arg9: memref<32x32xbf16, #tpu.memory_space<vmem>>, %arg10: memref<1x32xf32, #tpu.memory_space<vmem>>, %arg11: memref<1x32xf32, #tpu.memory_space<vmem>>, %arg12: memref<1x32xf32, #tpu.memory_space<vmem>>, %arg13: memref<32x128xbf16, #tpu.memory_space<vmem>>, %arg14: memref<1x128xf32, #tpu.memory_space<vmem>>, %arg15: memref<128x32xbf16, #tpu.memory_space<vmem>>, %arg16: memref<1x32xf32, #tpu.memory_space<vmem>>, %arg17: memref<1x8x32xf32, #tpu.memory_space<vmem>>, %arg18: memref<8x32xbf16, #tpu.memory_space<vmem>>) attributes {dimension_semantics = [#tpu.dimension_semantics<parallel>, #tpu.dimension_semantics<parallel>], iteration_bounds = array<i64: 2, 1>, scalar_prefetch = 0 : i64, scratch_operands = 1 : i64, tpu.core_type = #tpu.core_type<tc>, window_params = [{transform_indices = @transform_0, window_bounds = array<i64: 1, 8, 32>}, {transform_indices = @transform_1, window_bounds = array<i64: 1, 32, 128>}, {transform_indices = @transform_2, window_bounds = array<i64: 1, 128, 32>}, {pipeline_mode = #tpu.pipeline_mode<synchronous>, transform_indices = @transform_3, window_bounds = array<i64: 1, 32>}, {pipeline_mode = #tpu.pipeline_mode<synchronous>, transform_indices = @transform_4, window_bounds = array<i64: 1, 32>}, {pipeline_mode = #tpu.pipeline_mode<synchronous>, transform_indices = @transform_5, window_bounds = array<i64: 32, 32>}, {pipeline_mode = #tpu.pipeline_mode<synchronous>, transform_indices = @transform_6, window_bounds = array<i64: 1, 32>}, {pipeline_mode = #tpu.pipeline_mode<synchronous>, transform_indices = @transform_7, window_bounds = array<i64: 32, 32>}, {pipeline_mode = #tpu.pipeline_mode<synchronous>, transform_indices = @transform_8, window_bounds = array<i64: 1, 32>}, {pipeline_mode = #tpu.pipeline_mode<synchronous>, transform_indices = @transform_9, window_bounds = array<i64: 1, 32>}, {pipeline_mode = #tpu.pipeline_mode<synchronous>, transform_indices = @transform_10, window_bounds = array<i64: 1, 32>}, {pipeline_mode = #tpu.pipeline_mode<synchronous>, transform_indices = @transform_11, window_bounds = array<i64: 32, 128>}, {pipeline_mode = #tpu.pipeline_mode<synchronous>, transform_indices = @transform_12, window_bounds = array<i64: 1, 128>}, {pipeline_mode = #tpu.pipeline_mode<synchronous>, transform_indices = @transform_13, window_bounds = array<i64: 128, 32>}, {pipeline_mode = #tpu.pipeline_mode<synchronous>, transform_indices = @transform_14, window_bounds = array<i64: 1, 32>}, {transform_indices = @transform_15, window_bounds = array<i64: 1, 8, 32>}]} {
    %c0 = arith.constant 0 : index
    %c0_0 = arith.constant 0 : index
    %c0_1 = arith.constant 0 : index
    %0 = vector.load %arg2[%c0, %c0_0, %c0_1] : memref<1x8x32xf32, #tpu.memory_space<vmem>>, vector<1x8x32xf32>
    %1 = vector.shape_cast %0 : vector<1x8x32xf32> to vector<8x32xf32>
    %c0_2 = arith.constant 0 : index
    %c0_3 = arith.constant 0 : index
    %2 = vector.load %arg5[%c0_2, %c0_3] : memref<1x32xf32, #tpu.memory_space<vmem>>, vector<1x32xf32>
    %c0_4 = arith.constant 0 : index
    %c0_5 = arith.constant 0 : index
    %3 = vector.load %arg6[%c0_4, %c0_5] : memref<1x32xf32, #tpu.memory_space<vmem>>, vector<1x32xf32>
    %cst = arith.constant dense<0.000000e+00> : vector<8xf32>
    %4 = vector.multi_reduction <add>, %1, %cst [1] : vector<8x32xf32> to vector<8xf32>
    %5 = vector.shape_cast %4 : vector<8xf32> to vector<8x1xf32>
    %cst_6 = arith.constant 3.200000e+01 : f32
    %6 = vector.broadcast %cst_6 : f32 to vector<8x1xf32>
    %7 = arith.divf %5, %6 : vector<8x1xf32>
    %8 = vector.broadcast %7 : vector<8x1xf32> to vector<8x32xf32>
    %9 = arith.subf %1, %8 : vector<8x32xf32>
    %10 = arith.mulf %9, %9 : vector<8x32xf32>
    %cst_7 = arith.constant dense<0.000000e+00> : vector<8xf32>
    %11 = vector.multi_reduction <add>, %10, %cst_7 [1] : vector<8x32xf32> to vector<8xf32>
    %12 = vector.shape_cast %11 : vector<8xf32> to vector<8x1xf32>
    %cst_8 = arith.constant 3.200000e+01 : f32
    %13 = vector.broadcast %cst_8 : f32 to vector<8x1xf32>
    %14 = arith.divf %12, %13 : vector<8x1xf32>
    %15 = vector.broadcast %7 : vector<8x1xf32> to vector<8x32xf32>
    %16 = arith.subf %1, %15 : vector<8x32xf32>
    %cst_9 = arith.constant 9.99999974E-6 : f32
    %17 = vector.broadcast %cst_9 : f32 to vector<8x1xf32>
    %18 = arith.addf %14, %17 : vector<8x1xf32>
    %19 = math.rsqrt %18 : vector<8x1xf32>
    %20 = vector.broadcast %19 : vector<8x1xf32> to vector<8x32xf32>
    %21 = arith.mulf %16, %20 : vector<8x32xf32>
    %22 = vector.broadcast %2 : vector<1x32xf32> to vector<8x32xf32>
    %23 = arith.mulf %21, %22 : vector<8x32xf32>
    %24 = vector.broadcast %3 : vector<1x32xf32> to vector<8x32xf32>
    %25 = arith.addf %23, %24 : vector<8x32xf32>
    %26 = arith.truncf %25 : vector<8x32xf32> to vector<8x32xbf16>
    %c0_10 = arith.constant 0 : index
    %c0_11 = arith.constant 0 : index
    %27 = vector.load %arg7[%c0_10, %c0_11] : memref<32x32xbf16, #tpu.memory_space<vmem>>, vector<32x32xbf16>
    %cst_12 = arith.constant dense<0.000000e+00> : vector<8x32xf32>
    %28 = tpu.matmul %26, %27, %cst_12 {dimension_numbers = #tpu.dot_dimension_numbers<[1], [0], [0], [1], [0, 0, 1, 1], [], []>} : vector<8x32xbf16>, vector<32x32xbf16>, vector<8x32xf32> -> vector<8x32xf32>
    %c0_13 = arith.constant 0 : index
    %c0_14 = arith.constant 0 : index
    %29 = vector.load %arg8[%c0_13, %c0_14] : memref<1x32xf32, #tpu.memory_space<vmem>>, vector<1x32xf32>
    %30 = vector.broadcast %29 : vector<1x32xf32> to vector<8x32xf32>
    %31 = arith.addf %28, %30 : vector<8x32xf32>
    %32 = arith.truncf %31 : vector<8x32xf32> to vector<8x32xbf16>
    %c0_15 = arith.constant 0 : index
    %c0_16 = arith.constant 0 : index
    %c0_17 = arith.constant 0 : index
    %33 = vector.load %arg3[%c0_15, %c0_16, %c0_17] : memref<1x32x128xbf16, #tpu.memory_space<vmem>>, vector<1x32x128xbf16>
    %34 = vector.shape_cast %33 : vector<1x32x128xbf16> to vector<32x128xbf16>
    %c0_18 = arith.constant 0 : index
    %c0_19 = arith.constant 0 : index
    %c0_20 = arith.constant 0 : index
    %35 = vector.load %arg4[%c0_18, %c0_19, %c0_20] : memref<1x128x32xbf16, #tpu.memory_space<vmem>>, vector<1x128x32xbf16>
    %36 = vector.shape_cast %35 : vector<1x128x32xbf16> to vector<128x32xbf16>
    %37 = tpu.iota {dimensions = array<i32: 1>} : vector<1x128xi32>
    %c8_i32 = arith.constant 8 : i32
    %38 = vector.broadcast %c8_i32 : i32 to vector<1x128xi32>
    %39 = arith.cmpi slt, %37, %38 : vector<1x128xi32>
    %40 = vector.extract_strided_slice %32 {offsets = [0, 0], sizes = [8, 8], strides = [1, 1]} : vector<8x32xbf16> to vector<8x8xbf16>
    %41 = vector.extract_strided_slice %34 {offsets = [0, 0], sizes = [8, 128], strides = [1, 1]} : vector<32x128xbf16> to vector<8x128xbf16>
    %cst_21 = arith.constant dense<0.000000e+00> : vector<8x128xf32>
    %42 = tpu.matmul %40, %41, %cst_21 {dimension_numbers = #tpu.dot_dimension_numbers<[1], [0], [0], [1], [0, 0, 1, 1], [], []>} : vector<8x8xbf16>, vector<8x128xbf16>, vector<8x128xf32> -> vector<8x128xf32>
    %cst_22 = arith.constant -1.000000e+30 : f32
    %43 = vector.shape_cast %39 : vector<1x128xi1> to vector<1x128xi1>
    %44 = vector.broadcast %43 : vector<1x128xi1> to vector<8x128xi1>
    %45 = vector.broadcast %cst_22 : f32 to vector<8x128xf32>
    %46 = arith.select %44, %42, %45 : vector<8x128xi1>, vector<8x128xf32>
    %cst_23 = arith.constant dense<0xFF800000> : vector<8xf32>
    %47 = vector.multi_reduction <maximumf>, %46, %cst_23 [1] : vector<8x128xf32> to vector<8xf32>
    %48 = vector.shape_cast %47 : vector<8xf32> to vector<8x1xf32>
    %49 = vector.broadcast %48 : vector<8x1xf32> to vector<8x128xf32>
    %50 = arith.subf %46, %49 : vector<8x128xf32>
    %51 = math.exp %50 : vector<8x128xf32>
    %cst_24 = arith.constant dense<0.000000e+00> : vector<8xf32>
    %52 = vector.multi_reduction <add>, %51, %cst_24 [1] : vector<8x128xf32> to vector<8xf32>
    %53 = vector.shape_cast %52 : vector<8xf32> to vector<8x1xf32>
    %54 = tpu.reciprocal %53 {approx = true} : vector<8x1xf32> -> vector<8x1xf32>
    %55 = vector.broadcast %54 : vector<8x1xf32> to vector<8x128xf32>
    %56 = arith.mulf %51, %55 : vector<8x128xf32>
    %57 = arith.truncf %56 : vector<8x128xf32> to vector<8x128xbf16>
    %58 = vector.extract_strided_slice %36 {offsets = [0, 0], sizes = [128, 8], strides = [1, 1]} : vector<128x32xbf16> to vector<128x8xbf16>
    %cst_25 = arith.constant dense<0.000000e+00> : vector<8x8xf32>
    %59 = tpu.matmul %57, %58, %cst_25 {dimension_numbers = #tpu.dot_dimension_numbers<[1], [0], [0], [1], [0, 0, 1, 1], [], []>} : vector<8x128xbf16>, vector<128x8xbf16>, vector<8x8xf32> -> vector<8x8xf32>
    %60 = arith.truncf %59 : vector<8x8xf32> to vector<8x8xbf16>
    %c0_26 = arith.constant 0 : index
    %c0_27 = arith.constant 0 : index
    %61 = vector.load %arg18[%c0_26, %c0_27] : memref<8x32xbf16, #tpu.memory_space<vmem>>, vector<8x8xbf16>
    tpu.vector_store %arg18[%c0_26, %c0_27], %60 {strides = array<i32>} : memref<8x32xbf16, #tpu.memory_space<vmem>>, vector<8x8xbf16>,
    %62 = vector.extract_strided_slice %32 {offsets = [0, 8], sizes = [8, 8], strides = [1, 1]} : vector<8x32xbf16> to vector<8x8xbf16>
    %63 = vector.extract_strided_slice %34 {offsets = [8, 0], sizes = [8, 128], strides = [1, 1]} : vector<32x128xbf16> to vector<8x128xbf16>
    %cst_28 = arith.constant dense<0.000000e+00> : vector<8x128xf32>
    %64 = tpu.matmul %62, %63, %cst_28 {dimension_numbers = #tpu.dot_dimension_numbers<[1], [0], [0], [1], [0, 0, 1, 1], [], []>} : vector<8x8xbf16>, vector<8x128xbf16>, vector<8x128xf32> -> vector<8x128xf32>
    %cst_29 = arith.constant -1.000000e+30 : f32
    %65 = vector.shape_cast %39 : vector<1x128xi1> to vector<1x128xi1>
    %66 = vector.broadcast %65 : vector<1x128xi1> to vector<8x128xi1>
    %67 = vector.broadcast %cst_29 : f32 to vector<8x128xf32>
    %68 = arith.select %66, %64, %67 : vector<8x128xi1>, vector<8x128xf32>
    %cst_30 = arith.constant dense<0xFF800000> : vector<8xf32>
    %69 = vector.multi_reduction <maximumf>, %68, %cst_30 [1] : vector<8x128xf32> to vector<8xf32>
    %70 = vector.shape_cast %69 : vector<8xf32> to vector<8x1xf32>
    %71 = vector.broadcast %70 : vector<8x1xf32> to vector<8x128xf32>
    %72 = arith.subf %68, %71 : vector<8x128xf32>
    %73 = math.exp %72 : vector<8x128xf32>
    %cst_31 = arith.constant dense<0.000000e+00> : vector<8xf32>
    %74 = vector.multi_reduction <add>, %73, %cst_31 [1] : vector<8x128xf32> to vector<8xf32>
    %75 = vector.shape_cast %74 : vector<8xf32> to vector<8x1xf32>
    %76 = tpu.reciprocal %75 {approx = true} : vector<8x1xf32> -> vector<8x1xf32>
    %77 = vector.broadcast %76 : vector<8x1xf32> to vector<8x128xf32>
    %78 = arith.mulf %73, %77 : vector<8x128xf32>
    %79 = arith.truncf %78 : vector<8x128xf32> to vector<8x128xbf16>
    %80 = vector.extract_strided_slice %36 {offsets = [0, 8], sizes = [128, 8], strides = [1, 1]} : vector<128x32xbf16> to vector<128x8xbf16>
    %cst_32 = arith.constant dense<0.000000e+00> : vector<8x8xf32>
    %81 = tpu.matmul %79, %80, %cst_32 {dimension_numbers = #tpu.dot_dimension_numbers<[1], [0], [0], [1], [0, 0, 1, 1], [], []>} : vector<8x128xbf16>, vector<128x8xbf16>, vector<8x8xf32> -> vector<8x8xf32>
    %82 = arith.truncf %81 : vector<8x8xf32> to vector<8x8xbf16>
    %c0_33 = arith.constant 0 : index
    %c8 = arith.constant 8 : index
    %83 = vector.load %arg18[%c0_33, %c8] : memref<8x32xbf16, #tpu.memory_space<vmem>>, vector<8x8xbf16>
    tpu.vector_store %arg18[%c0_33, %c8], %82 {strides = array<i32>} : memref<8x32xbf16, #tpu.memory_space<vmem>>, vector<8x8xbf16>,
    %84 = vector.extract_strided_slice %32 {offsets = [0, 16], sizes = [8, 8], strides = [1, 1]} : vector<8x32xbf16> to vector<8x8xbf16>
    %85 = vector.extract_strided_slice %34 {offsets = [16, 0], sizes = [8, 128], strides = [1, 1]} : vector<32x128xbf16> to vector<8x128xbf16>
    %cst_34 = arith.constant dense<0.000000e+00> : vector<8x128xf32>
    %86 = tpu.matmul %84, %85, %cst_34 {dimension_numbers = #tpu.dot_dimension_numbers<[1], [0], [0], [1], [0, 0, 1, 1], [], []>} : vector<8x8xbf16>, vector<8x128xbf16>, vector<8x128xf32> -> vector<8x128xf32>
    %cst_35 = arith.constant -1.000000e+30 : f32
    %87 = vector.shape_cast %39 : vector<1x128xi1> to vector<1x128xi1>
    %88 = vector.broadcast %87 : vector<1x128xi1> to vector<8x128xi1>
    %89 = vector.broadcast %cst_35 : f32 to vector<8x128xf32>
    %90 = arith.select %88, %86, %89 : vector<8x128xi1>, vector<8x128xf32>
    %cst_36 = arith.constant dense<0xFF800000> : vector<8xf32>
    %91 = vector.multi_reduction <maximumf>, %90, %cst_36 [1] : vector<8x128xf32> to vector<8xf32>
    %92 = vector.shape_cast %91 : vector<8xf32> to vector<8x1xf32>
    %93 = vector.broadcast %92 : vector<8x1xf32> to vector<8x128xf32>
    %94 = arith.subf %90, %93 : vector<8x128xf32>
    %95 = math.exp %94 : vector<8x128xf32>
    %cst_37 = arith.constant dense<0.000000e+00> : vector<8xf32>
    %96 = vector.multi_reduction <add>, %95, %cst_37 [1] : vector<8x128xf32> to vector<8xf32>
    %97 = vector.shape_cast %96 : vector<8xf32> to vector<8x1xf32>
    %98 = tpu.reciprocal %97 {approx = true} : vector<8x1xf32> -> vector<8x1xf32>
    %99 = vector.broadcast %98 : vector<8x1xf32> to vector<8x128xf32>
    %100 = arith.mulf %95, %99 : vector<8x128xf32>
    %101 = arith.truncf %100 : vector<8x128xf32> to vector<8x128xbf16>
    %102 = vector.extract_strided_slice %36 {offsets = [0, 16], sizes = [128, 8], strides = [1, 1]} : vector<128x32xbf16> to vector<128x8xbf16>
    %cst_38 = arith.constant dense<0.000000e+00> : vector<8x8xf32>
    %103 = tpu.matmul %101, %102, %cst_38 {dimension_numbers = #tpu.dot_dimension_numbers<[1], [0], [0], [1], [0, 0, 1, 1], [], []>} : vector<8x128xbf16>, vector<128x8xbf16>, vector<8x8xf32> -> vector<8x8xf32>
    %104 = arith.truncf %103 : vector<8x8xf32> to vector<8x8xbf16>
    %c0_39 = arith.constant 0 : index
    %c16 = arith.constant 16 : index
    %105 = vector.load %arg18[%c0_39, %c16] : memref<8x32xbf16, #tpu.memory_space<vmem>>, vector<8x8xbf16>
    tpu.vector_store %arg18[%c0_39, %c16], %104 {strides = array<i32>} : memref<8x32xbf16, #tpu.memory_space<vmem>>, vector<8x8xbf16>,
    %106 = vector.extract_strided_slice %32 {offsets = [0, 24], sizes = [8, 8], strides = [1, 1]} : vector<8x32xbf16> to vector<8x8xbf16>
    %107 = vector.extract_strided_slice %34 {offsets = [24, 0], sizes = [8, 128], strides = [1, 1]} : vector<32x128xbf16> to vector<8x128xbf16>
    %cst_40 = arith.constant dense<0.000000e+00> : vector<8x128xf32>
    %108 = tpu.matmul %106, %107, %cst_40 {dimension_numbers = #tpu.dot_dimension_numbers<[1], [0], [0], [1], [0, 0, 1, 1], [], []>} : vector<8x8xbf16>, vector<8x128xbf16>, vector<8x128xf32> -> vector<8x128xf32>
    %cst_41 = arith.constant -1.000000e+30 : f32
    %109 = vector.shape_cast %39 : vector<1x128xi1> to vector<1x128xi1>
    %110 = vector.broadcast %109 : vector<1x128xi1> to vector<8x128xi1>
    %111 = vector.broadcast %cst_41 : f32 to vector<8x128xf32>
    %112 = arith.select %110, %108, %111 : vector<8x128xi1>, vector<8x128xf32>
    %cst_42 = arith.constant dense<0xFF800000> : vector<8xf32>
    %113 = vector.multi_reduction <maximumf>, %112, %cst_42 [1] : vector<8x128xf32> to vector<8xf32>
    %114 = vector.shape_cast %113 : vector<8xf32> to vector<8x1xf32>
    %115 = vector.broadcast %114 : vector<8x1xf32> to vector<8x128xf32>
    %116 = arith.subf %112, %115 : vector<8x128xf32>
    %117 = math.exp %116 : vector<8x128xf32>
    %cst_43 = arith.constant dense<0.000000e+00> : vector<8xf32>
    %118 = vector.multi_reduction <add>, %117, %cst_43 [1] : vector<8x128xf32> to vector<8xf32>
    %119 = vector.shape_cast %118 : vector<8xf32> to vector<8x1xf32>
    %120 = tpu.reciprocal %119 {approx = true} : vector<8x1xf32> -> vector<8x1xf32>
    %121 = vector.broadcast %120 : vector<8x1xf32> to vector<8x128xf32>
    %122 = arith.mulf %117, %121 : vector<8x128xf32>
    %123 = arith.truncf %122 : vector<8x128xf32> to vector<8x128xbf16>
    %124 = vector.extract_strided_slice %36 {offsets = [0, 24], sizes = [128, 8], strides = [1, 1]} : vector<128x32xbf16> to vector<128x8xbf16>
    %cst_44 = arith.constant dense<0.000000e+00> : vector<8x8xf32>
    %125 = tpu.matmul %123, %124, %cst_44 {dimension_numbers = #tpu.dot_dimension_numbers<[1], [0], [0], [1], [0, 0, 1, 1], [], []>} : vector<8x128xbf16>, vector<128x8xbf16>, vector<8x8xf32> -> vector<8x8xf32>
    %126 = arith.truncf %125 : vector<8x8xf32> to vector<8x8xbf16>
    %c0_45 = arith.constant 0 : index
    %c24 = arith.constant 24 : index
    %127 = vector.load %arg18[%c0_45, %c24] : memref<8x32xbf16, #tpu.memory_space<vmem>>, vector<8x8xbf16>
    tpu.vector_store %arg18[%c0_45, %c24], %126 {strides = array<i32>} : memref<8x32xbf16, #tpu.memory_space<vmem>>, vector<8x8xbf16>,
    %c0_46 = arith.constant 0 : index
    %c0_47 = arith.constant 0 : index
    %128 = vector.load %arg18[%c0_46, %c0_47] : memref<8x32xbf16, #tpu.memory_space<vmem>>, vector<8x32xbf16>
    %c0_48 = arith.constant 0 : index
    %c0_49 = arith.constant 0 : index
    %129 = vector.load %arg9[%c0_48, %c0_49] : memref<32x32xbf16, #tpu.memory_space<vmem>>, vector<32x32xbf16>
    %cst_50 = arith.constant dense<0.000000e+00> : vector<8x32xf32>
    %130 = tpu.matmul %128, %129, %cst_50 {dimension_numbers = #tpu.dot_dimension_numbers<[1], [0], [0], [1], [0, 0, 1, 1], [], []>} : vector<8x32xbf16>, vector<32x32xbf16>, vector<8x32xf32> -> vector<8x32xf32>
    %c0_51 = arith.constant 0 : index
    %c0_52 = arith.constant 0 : index
    %131 = vector.load %arg10[%c0_51, %c0_52] : memref<1x32xf32, #tpu.memory_space<vmem>>, vector<1x32xf32>
    %132 = vector.broadcast %131 : vector<1x32xf32> to vector<8x32xf32>
    %133 = arith.addf %130, %132 : vector<8x32xf32>
    %134 = arith.addf %1, %133 : vector<8x32xf32>
    %c0_53 = arith.constant 0 : index
    %c0_54 = arith.constant 0 : index
    %135 = vector.load %arg11[%c0_53, %c0_54] : memref<1x32xf32, #tpu.memory_space<vmem>>, vector<1x32xf32>
    %c0_55 = arith.constant 0 : index
    %c0_56 = arith.constant 0 : index
    %136 = vector.load %arg12[%c0_55, %c0_56] : memref<1x32xf32, #tpu.memory_space<vmem>>, vector<1x32xf32>
    %cst_57 = arith.constant dense<0.000000e+00> : vector<8xf32>
    %137 = vector.multi_reduction <add>, %134, %cst_57 [1] : vector<8x32xf32> to vector<8xf32>
    %138 = vector.shape_cast %137 : vector<8xf32> to vector<8x1xf32>
    %cst_58 = arith.constant 3.200000e+01 : f32
    %139 = vector.broadcast %cst_58 : f32 to vector<8x1xf32>
    %140 = arith.divf %138, %139 : vector<8x1xf32>
    %141 = vector.broadcast %140 : vector<8x1xf32> to vector<8x32xf32>
    %142 = arith.subf %134, %141 : vector<8x32xf32>
    %143 = arith.mulf %142, %142 : vector<8x32xf32>
    %cst_59 = arith.constant dense<0.000000e+00> : vector<8xf32>
    %144 = vector.multi_reduction <add>, %143, %cst_59 [1] : vector<8x32xf32> to vector<8xf32>
    %145 = vector.shape_cast %144 : vector<8xf32> to vector<8x1xf32>
    %cst_60 = arith.constant 3.200000e+01 : f32
    %146 = vector.broadcast %cst_60 : f32 to vector<8x1xf32>
    %147 = arith.divf %145, %146 : vector<8x1xf32>
    %148 = vector.broadcast %140 : vector<8x1xf32> to vector<8x32xf32>
    %149 = arith.subf %134, %148 : vector<8x32xf32>
    %cst_61 = arith.constant 9.99999974E-6 : f32
    %150 = vector.broadcast %cst_61 : f32 to vector<8x1xf32>
    %151 = arith.addf %147, %150 : vector<8x1xf32>
    %152 = math.rsqrt %151 : vector<8x1xf32>
    %153 = vector.broadcast %152 : vector<8x1xf32> to vector<8x32xf32>
    %154 = arith.mulf %149, %153 : vector<8x32xf32>
    %155 = vector.broadcast %135 : vector<1x32xf32> to vector<8x32xf32>
    %156 = arith.mulf %154, %155 : vector<8x32xf32>
    %157 = vector.broadcast %136 : vector<1x32xf32> to vector<8x32xf32>
    %158 = arith.addf %156, %157 : vector<8x32xf32>
    %159 = arith.truncf %158 : vector<8x32xf32> to vector<8x32xbf16>
    %c0_62 = arith.constant 0 : index
    %c0_63 = arith.constant 0 : index
    %160 = vector.load %arg13[%c0_62, %c0_63] : memref<32x128xbf16, #tpu.memory_space<vmem>>, vector<32x128xbf16>
    %cst_64 = arith.constant dense<0.000000e+00> : vector<8x128xf32>
    %161 = tpu.matmul %159, %160, %cst_64 {dimension_numbers = #tpu.dot_dimension_numbers<[1], [0], [0], [1], [0, 0, 1, 1], [], []>} : vector<8x32xbf16>, vector<32x128xbf16>, vector<8x128xf32> -> vector<8x128xf32>
    %c0_65 = arith.constant 0 : index
    %c0_66 = arith.constant 0 : index
    %162 = vector.load %arg14[%c0_65, %c0_66] : memref<1x128xf32, #tpu.memory_space<vmem>>, vector<1x128xf32>
    %163 = vector.broadcast %162 : vector<1x128xf32> to vector<8x128xf32>
    %164 = arith.addf %161, %163 : vector<8x128xf32>
    %cst_67 = arith.constant 1.702000e+00 : f32
    %165 = vector.broadcast %cst_67 : f32 to vector<8x128xf32>
    %166 = arith.mulf %165, %164 : vector<8x128xf32>
    %167 = arith.negf %166 : vector<8x128xf32>
    %168 = math.exp %167 : vector<8x128xf32>
    %cst_68 = arith.constant 1.000000e+00 : f32
    %169 = vector.broadcast %cst_68 : f32 to vector<8x128xf32>
    %170 = arith.addf %169, %168 : vector<8x128xf32>
    %171 = arith.divf %169, %170 : vector<8x128xf32>
    %172 = arith.mulf %164, %171 : vector<8x128xf32>
    %173 = arith.truncf %172 : vector<8x128xf32> to vector<8x128xbf16>
    %c0_69 = arith.constant 0 : index
    %c0_70 = arith.constant 0 : index
    %174 = vector.load %arg15[%c0_69, %c0_70] : memref<128x32xbf16, #tpu.memory_space<vmem>>, vector<128x32xbf16>
    %cst_71 = arith.constant dense<0.000000e+00> : vector<8x32xf32>
    %175 = tpu.matmul %173, %174, %cst_71 {dimension_numbers = #tpu.dot_dimension_numbers<[1], [0], [0], [1], [0, 0, 1, 1], [], []>} : vector<8x128xbf16>, vector<128x32xbf16>, vector<8x32xf32> -> vector<8x32xf32>
    %c0_72 = arith.constant 0 : index
    %c0_73 = arith.constant 0 : index
    %176 = vector.load %arg16[%c0_72, %c0_73] : memref<1x32xf32, #tpu.memory_space<vmem>>, vector<1x32xf32>
    %177 = vector.broadcast %176 : vector<1x32xf32> to vector<8x32xf32>
    %178 = arith.addf %175, %177 : vector<8x32xf32>
    %179 = arith.addf %134, %178 : vector<8x32xf32>
    %c0_74 = arith.constant 0 : index
    %c0_75 = arith.constant 0 : index
    %c0_76 = arith.constant 0 : index
    %180 = vector.load %arg17[%c0_74, %c0_75, %c0_76] : memref<1x8x32xf32, #tpu.memory_space<vmem>>, vector<1x8x32xf32>
    %181 = vector.shape_cast %180 : vector<1x8x32xf32> to vector<8x32xf32>
    %182 = vector.shape_cast %179 : vector<8x32xf32> to vector<1x8x32xf32>
    tpu.vector_store %arg17[%c0_74, %c0_75, %c0_76], %182 {strides = array<i32>} : memref<1x8x32xf32, #tpu.memory_space<vmem>>, vector<1x8x32xf32>,
    return
  }
  func.func @transform_0(%arg0: i32, %arg1: i32) -> (i32, i32, i32) {
    %c0_i32 = arith.constant 0 : i32
    %c0_i32_0 = arith.constant 0 : i32
    return %arg0, %arg1, %c0_i32 : i32, i32, i32
  }
  func.func @transform_1(%arg0: i32, %arg1: i32) -> (i32, i32, i32) {
    %c0_i32 = arith.constant 0 : i32
    %c0_i32_0 = arith.constant 0 : i32
    %c0_i32_1 = arith.constant 0 : i32
    return %arg0, %c0_i32, %c0_i32_0 : i32, i32, i32
  }
  func.func @transform_2(%arg0: i32, %arg1: i32) -> (i32, i32, i32) {
    %c0_i32 = arith.constant 0 : i32
    %c0_i32_0 = arith.constant 0 : i32
    %c0_i32_1 = arith.constant 0 : i32
    return %arg0, %c0_i32, %c0_i32_0 : i32, i32, i32
  }
  func.func @transform_3(%arg0: i32, %arg1: i32) -> (i32, i32) {
    %c0_i32 = arith.constant 0 : i32
    %c0_i32_0 = arith.constant 0 : i32
    %c0_i32_1 = arith.constant 0 : i32
    return %c0_i32, %c0_i32_0 : i32, i32
  }
  func.func @transform_4(%arg0: i32, %arg1: i32) -> (i32, i32) {
    %c0_i32 = arith.constant 0 : i32
    %c0_i32_0 = arith.constant 0 : i32
    %c0_i32_1 = arith.constant 0 : i32
    return %c0_i32, %c0_i32_0 : i32, i32
  }
  func.func @transform_5(%arg0: i32, %arg1: i32) -> (i32, i32) {
    %c0_i32 = arith.constant 0 : i32
    %c0_i32_0 = arith.constant 0 : i32
    %c0_i32_1 = arith.constant 0 : i32
    return %c0_i32, %c0_i32_0 : i32, i32
  }
  func.func @transform_6(%arg0: i32, %arg1: i32) -> (i32, i32) {
    %c0_i32 = arith.constant 0 : i32
    %c0_i32_0 = arith.constant 0 : i32
    %c0_i32_1 = arith.constant 0 : i32
    return %c0_i32, %c0_i32_0 : i32, i32
  }
  func.func @transform_7(%arg0: i32, %arg1: i32) -> (i32, i32) {
    %c0_i32 = arith.constant 0 : i32
    %c0_i32_0 = arith.constant 0 : i32
    %c0_i32_1 = arith.constant 0 : i32
    return %c0_i32, %c0_i32_0 : i32, i32
  }
  func.func @transform_8(%arg0: i32, %arg1: i32) -> (i32, i32) {
    %c0_i32 = arith.constant 0 : i32
    %c0_i32_0 = arith.constant 0 : i32
    %c0_i32_1 = arith.constant 0 : i32
    return %c0_i32, %c0_i32_0 : i32, i32
  }
  func.func @transform_9(%arg0: i32, %arg1: i32) -> (i32, i32) {
    %c0_i32 = arith.constant 0 : i32
    %c0_i32_0 = arith.constant 0 : i32
    %c0_i32_1 = arith.constant 0 : i32
    return %c0_i32, %c0_i32_0 : i32, i32
  }
  func.func @transform_10(%arg0: i32, %arg1: i32) -> (i32, i32) {
    %c0_i32 = arith.constant 0 : i32
    %c0_i32_0 = arith.constant 0 : i32
    %c0_i32_1 = arith.constant 0 : i32
    return %c0_i32, %c0_i32_0 : i32, i32
  }
  func.func @transform_11(%arg0: i32, %arg1: i32) -> (i32, i32) {
    %c0_i32 = arith.constant 0 : i32
    %c0_i32_0 = arith.constant 0 : i32
    %c0_i32_1 = arith.constant 0 : i32
    return %c0_i32, %c0_i32_0 : i32, i32
  }
  func.func @transform_12(%arg0: i32, %arg1: i32) -> (i32, i32) {
    %c0_i32 = arith.constant 0 : i32
    %c0_i32_0 = arith.constant 0 : i32
    %c0_i32_1 = arith.constant 0 : i32
    return %c0_i32, %c0_i32_0 : i32, i32
  }
  func.func @transform_13(%arg0: i32, %arg1: i32) -> (i32, i32) {
    %c0_i32 = arith.constant 0 : i32
    %c0_i32_0 = arith.constant 0 : i32
    %c0_i32_1 = arith.constant 0 : i32
    return %c0_i32, %c0_i32_0 : i32, i32
  }
  func.func @transform_14(%arg0: i32, %arg1: i32) -> (i32, i32) {
    %c0_i32 = arith.constant 0 : i32
    %c0_i32_0 = arith.constant 0 : i32
    %c0_i32_1 = arith.constant 0 : i32
    return %c0_i32, %c0_i32_0 : i32, i32
  }
  func.func @transform_15(%arg0: i32, %arg1: i32) -> (i32, i32, i32) {
    %c0_i32 = arith.constant 0 : i32
    %c0_i32_0 = arith.constant 0 : i32
    return %arg0, %arg1, %c0_i32 : i32, i32, i32
  }
}

</mosaic_0001>

<llo_original>
// kernel: tpu_custom_call.1
$region0: #{tpu_custom_call.1}
  #allocation0 [shape = 'u32[]', space=smem, size = 0x4, offset = 0x4, fixed_abs, tag = 'smem constant byte address 0x4 - core index']
  #allocation1 [shape = 'u32[144,128]{1,0:T(1,128)}', space=vmem, size = 0x12000, scoped, tag = 'internal scratch']
  #allocation2 [shape = 'bf16[8,32]{1,0:T(8,128)(2,1)}', space=vmem, size = 0x800, scoped, tag = 'scratch operand']
  %s0 = inlined_call_operand.vmem [shape: f32[2,8,32], index: 0, kind: input, shape index: {}]
  %s1 = inlined_call_operand.vmem [shape: bf16[2,32,128], index: 1, kind: input, shape index: {}]
  %s2 = inlined_call_operand.vmem [shape: bf16[2,128,32], index: 2, kind: input, shape index: {}]
  %s3 = inlined_call_operand.vmem [shape: f32[1,32], index: 3, kind: input, shape index: {}]
  %s4 = inlined_call_operand.vmem [shape: f32[1,32], index: 4, kind: input, shape index: {}]
  %s5 = inlined_call_operand.vmem [shape: bf16[32,32], index: 5, kind: input, shape index: {}]
  %s6 = inlined_call_operand.vmem [shape: f32[1,32], index: 6, kind: input, shape index: {}]
  %s7 = inlined_call_operand.vmem [shape: bf16[32,32], index: 7, kind: input, shape index: {}]
  %s8 = inlined_call_operand.vmem [shape: f32[1,32], index: 8, kind: input, shape index: {}]
  %s9 = inlined_call_operand.vmem [shape: f32[1,32], index: 9, kind: input, shape index: {}]
  %s10 = inlined_call_operand.vmem [shape: f32[1,32], index: 10, kind: input, shape index: {}]
  %s11 = inlined_call_operand.vmem [shape: bf16[32,128], index: 11, kind: input, shape index: {}]
  %s12 = inlined_call_operand.vmem [shape: f32[1,128], index: 12, kind: input, shape index: {}]
  %s13 = inlined_call_operand.vmem [shape: bf16[128,32], index: 13, kind: input, shape index: {}]
  %s14 = inlined_call_operand.vmem [shape: f32[1,32], index: 14, kind: input, shape index: {}]
  %s15 = inlined_call_operand.hbm [shape: f32[2,8,32], index: 15, kind: output, shape index: {}]
  %s16 = sld [smem:[#allocation0]]
  $region93: #{tpu_custom_call.1} parent=0
    _
  %s18 = ssub.s32 1, %s16
  %s19 = scalar_select 0, %s18, %s16
  $region1: #{tpu_custom_call.1} parent=0
    #allocation3 [shape = 'u8[8192]{0}', space=vmem, size = 0x2000, scoped, tag = 'output window, operand 0']
    #allocation4 [shape = 's32[2]{0}', space=sflag, size = 0x8, scoped, tag = 'scoped memory for tpu_custom_call.1']
    %20 = vsyncpa [#allocation4], 0
    %s21 = scalar_lea.sflag [#allocation4], 1
    %22 = vsyncpa %s21, 0
    loop: start=0, step=1, limit=4
    $region2: #{tpu_custom_call.1} parent=1 // loop_pre_header
      _
    $region3: #{tpu_custom_call.1} parent=1 // loop_header
      %s24 = sphi 0, %s28
      %p25 = scmp.ge.s32.totalorder %s24, 4
      %s31 = sphi 0, %s43
      %s32 = sphi 0, %s39
      %s33 = sphi 0, %s31
      %s34 = sphi 0, %s32
      %s35 = sphi 0, %s33
      %s36 = sphi 0, %s34
      %s48 = sphi 0, %s50
      %s51 = sphi 0, %s48
      %s52 = sphi 0, %s51
      %s68 = sphi 0, %s52
      %s74 = sphi 0, %s76
      %s77 = sphi 0, %s74
      %s78 = sphi 0, %s77
      %s94 = sphi 0, %s78
      %s100 = sphi 0, %s102
      %s103 = sphi 0, %s100
      %s104 = sphi 0, %s103
      %s120 = sphi 0, %s104
      %s124 = sphi 0, %s124
      %s126 = sphi 0, %s124
      %s127 = sphi 0, %s126
      %s141 = sphi 0, %s127
      %s145 = sphi 0, %s145
      %s147 = sphi 0, %s145
      %s148 = sphi 0, %s147
      %s162 = sphi 0, %s148
      %s166 = sphi 0, %s166
      %s168 = sphi 0, %s166
      %s169 = sphi 0, %s168
      %s183 = sphi 0, %s169
      %s187 = sphi 0, %s187
      %s189 = sphi 0, %s187
      %s190 = sphi 0, %s189
      %s204 = sphi 0, %s190
      %s208 = sphi 0, %s208
      %s210 = sphi 0, %s208
      %s211 = sphi 0, %s210
      %s225 = sphi 0, %s211
      %s229 = sphi 0, %s229
      %s231 = sphi 0, %s229
      %s232 = sphi 0, %s231
      %s246 = sphi 0, %s232
      %s250 = sphi 0, %s250
      %s252 = sphi 0, %s250
      %s253 = sphi 0, %s252
      %s267 = sphi 0, %s253
      %s271 = sphi 0, %s271
      %s273 = sphi 0, %s271
      %s274 = sphi 0, %s273
      %s288 = sphi 0, %s274
      %s292 = sphi 0, %s292
      %s294 = sphi 0, %s292
      %s295 = sphi 0, %s294
      %s309 = sphi 0, %s295
      %s313 = sphi 0, %s313
      %s315 = sphi 0, %s313
      %s316 = sphi 0, %s315
      %s330 = sphi 0, %s316
      %s334 = sphi 0, %s334
      %s336 = sphi 0, %s334
      %s337 = sphi 0, %s336
      %s351 = sphi 0, %s337
      %s355 = sphi 0, %s355
      %s357 = sphi 0, %s355
      %s358 = sphi 0, %s357
      %s372 = sphi 0, %s358
      %s380 = sphi 0, %s382
      %s383 = sphi 0, %s380
      %s384 = sphi 0, %s383
      %s400 = sphi 0, %s384
    $region4: #{tpu_custom_call.1} parent=1 // loop_header_branch
      %27 = sbr.rel (%p25) target = $region8
    $region5: #{tpu_custom_call.1} parent=1 // loop_body
      %s29 = ssub.s32 %s24, 1
      %s30 = ssub.s32 %s24, 2
      %s37 = sadd.s32 1, %s32
      %p38 = scmp.ge.s32.totalorder %s37, 1
      %s39 = scalar_select %p38, 0, %s37
      %s40 = sadd.s32 1, %s31
      %s41 = scalar_select %p38, %s40, %s31
      %p42 = scmp.ge.s32.totalorder %s41, 2
      %s43 = scalar_select %p42, 0, %s41
      %s44 = ssub.s32 %s31, %s43
      %s45 = ssub.s32 %s32, %s39
      %s46 = sor.u32 %s44, %s45
      %p47 = scmp.eq.s32.totalorder %s46, 0
      %s49 = sadd.s32 %s48, 1
      %s50 = scalar_select %p47, %s48, %s49
      %p53 = pneg %p47
      %p54 = scmp.eq.s32.totalorder %s24, 1
      %p55 = por %p53, %p54
      %p56 = scmp.ne.s32.totalorder %s48, %s51
      %p57 = scmp.eq.s32.totalorder %s24, 0
      %p58 = por %p56, %p57
      %p59 = scmp.ne.s32.totalorder %s48, %s51
      %p60 = scmp.eq.s32.totalorder %s29, 1
      %p61 = por %p59, %p60
      %p62 = scmp.ne.s32.totalorder %s51, %s52
      %p63 = scmp.eq.s32.totalorder %s29, 0
      %p64 = por %p62, %p63
      %p65 = scmp.ne.s32.totalorder %s51, %s52
      %p66 = scmp.eq.s32.totalorder %s30, 1
      %p67 = por %p65, %p66
      %p69 = scmp.ne.s32.totalorder %s52, %s68
      %p70 = scmp.eq.s32.totalorder %s30, 0
      %p71 = por %p69, %p70
      %s72 = ssub.s32 %s31, %s43
      %p73 = scmp.eq.s32.totalorder %s72, 0
      %s75 = sadd.s32 %s74, 1
      %s76 = scalar_select %p73, %s74, %s75
      %p79 = pneg %p73
      %p80 = scmp.eq.s32.totalorder %s24, 1
      %p81 = por %p79, %p80
      %p82 = scmp.ne.s32.totalorder %s74, %s77
      %p83 = scmp.eq.s32.totalorder %s24, 0
      %p84 = por %p82, %p83
      %p85 = scmp.ne.s32.totalorder %s74, %s77
      %p86 = scmp.eq.s32.totalorder %s29, 1
      %p87 = por %p85, %p86
      %p88 = scmp.ne.s32.totalorder %s77, %s78
      %p89 = scmp.eq.s32.totalorder %s29, 0
      %p90 = por %p88, %p89
      %p91 = scmp.ne.s32.totalorder %s77, %s78
      %p92 = scmp.eq.s32.totalorder %s30, 1
      %p93 = por %p91, %p92
      %p95 = scmp.ne.s32.totalorder %s78, %s94
      %p96 = scmp.eq.s32.totalorder %s30, 0
      %p97 = por %p95, %p96
      %s98 = ssub.s32 %s31, %s43
      %p99 = scmp.eq.s32.totalorder %s98, 0
      %s101 = sadd.s32 %s100, 1
      %s102 = scalar_select %p99, %s100, %s101
      %p105 = pneg %p99
      %p106 = scmp.eq.s32.totalorder %s24, 1
      %p107 = por %p105, %p106
      %p108 = scmp.ne.s32.totalorder %s100, %s103
      %p109 = scmp.eq.s32.totalorder %s24, 0
      %p110 = por %p108, %p109
      %p111 = scmp.ne.s32.totalorder %s100, %s103
      %p112 = scmp.eq.s32.totalorder %s29, 1
      %p113 = por %p111, %p112
      %p114 = scmp.ne.s32.totalorder %s103, %s104
      %p115 = scmp.eq.s32.totalorder %s29, 0
      %p116 = por %p114, %p115
      %p117 = scmp.ne.s32.totalorder %s103, %s104
      %p118 = scmp.eq.s32.totalorder %s30, 1
      %p119 = por %p117, %p118
      %p121 = scmp.ne.s32.totalorder %s104, %s120
      %p122 = scmp.eq.s32.totalorder %s30, 0
      %p123 = por %p121, %p122
      %s125 = sadd.s32 %s124, 1
      %p128 = scmp.eq.s32.totalorder %s24, 1
      %p129 = scmp.ne.s32.totalorder %s124, %s126
      %p130 = scmp.eq.s32.totalorder %s24, 0
      %p131 = por %p129, %p130
      %p132 = scmp.ne.s32.totalorder %s124, %s126
      %p133 = scmp.eq.s32.totalorder %s29, 1
      %p134 = por %p132, %p133
      %p135 = scmp.ne.s32.totalorder %s126, %s127
      %p136 = scmp.eq.s32.totalorder %s29, 0
      %p137 = por %p135, %p136
      %p138 = scmp.ne.s32.totalorder %s126, %s127
      %p139 = scmp.eq.s32.totalorder %s30, 1
      %p140 = por %p138, %p139
      %p142 = scmp.ne.s32.totalorder %s127, %s141
      %p143 = scmp.eq.s32.totalorder %s30, 0
      %p144 = por %p142, %p143
      %s146 = sadd.s32 %s145, 1
      %p149 = scmp.eq.s32.totalorder %s24, 1
      %p150 = scmp.ne.s32.totalorder %s145, %s147
      %p151 = scmp.eq.s32.totalorder %s24, 0
      %p152 = por %p150, %p151
      %p153 = scmp.ne.s32.totalorder %s145, %s147
      %p154 = scmp.eq.s32.totalorder %s29, 1
      %p155 = por %p153, %p154
      %p156 = scmp.ne.s32.totalorder %s147, %s148
      %p157 = scmp.eq.s32.totalorder %s29, 0
      %p158 = por %p156, %p157
      %p159 = scmp.ne.s32.totalorder %s147, %s148
      %p160 = scmp.eq.s32.totalorder %s30, 1
      %p161 = por %p159, %p160
      %p163 = scmp.ne.s32.totalorder %s148, %s162
      %p164 = scmp.eq.s32.totalorder %s30, 0
      %p165 = por %p163, %p164
      %s167 = sadd.s32 %s166, 1
      %p170 = scmp.eq.s32.totalorder %s24, 1
      %p171 = scmp.ne.s32.totalorder %s166, %s168
      %p172 = scmp.eq.s32.totalorder %s24, 0
      %p173 = por %p171, %p172
      %p174 = scmp.ne.s32.totalorder %s166, %s168
      %p175 = scmp.eq.s32.totalorder %s29, 1
      %p176 = por %p174, %p175
      %p177 = scmp.ne.s32.totalorder %s168, %s169
      %p178 = scmp.eq.s32.totalorder %s29, 0
      %p179 = por %p177, %p178
      %p180 = scmp.ne.s32.totalorder %s168, %s169
      %p181 = scmp.eq.s32.totalorder %s30, 1
      %p182 = por %p180, %p181
      %p184 = scmp.ne.s32.totalorder %s169, %s183
      %p185 = scmp.eq.s32.totalorder %s30, 0
      %p186 = por %p184, %p185
      %s188 = sadd.s32 %s187, 1
      %p191 = scmp.eq.s32.totalorder %s24, 1
      %p192 = scmp.ne.s32.totalorder %s187, %s189
      %p193 = scmp.eq.s32.totalorder %s24, 0
      %p194 = por %p192, %p193
      %p195 = scmp.ne.s32.totalorder %s187, %s189
      %p196 = scmp.eq.s32.totalorder %s29, 1
      %p197 = por %p195, %p196
      %p198 = scmp.ne.s32.totalorder %s189, %s190
      %p199 = scmp.eq.s32.totalorder %s29, 0
      %p200 = por %p198, %p199
      %p201 = scmp.ne.s32.totalorder %s189, %s190
      %p202 = scmp.eq.s32.totalorder %s30, 1
      %p203 = por %p201, %p202
      %p205 = scmp.ne.s32.totalorder %s190, %s204
      %p206 = scmp.eq.s32.totalorder %s30, 0
      %p207 = por %p205, %p206
      %s209 = sadd.s32 %s208, 1
      %p212 = scmp.eq.s32.totalorder %s24, 1
      %p213 = scmp.ne.s32.totalorder %s208, %s210
      %p214 = scmp.eq.s32.totalorder %s24, 0
      %p215 = por %p213, %p214
      %p216 = scmp.ne.s32.totalorder %s208, %s210
      %p217 = scmp.eq.s32.totalorder %s29, 1
      %p218 = por %p216, %p217
      %p219 = scmp.ne.s32.totalorder %s210, %s211
      %p220 = scmp.eq.s32.totalorder %s29, 0
      %p221 = por %p219, %p220
      %p222 = scmp.ne.s32.totalorder %s210, %s211
      %p223 = scmp.eq.s32.totalorder %s30, 1
      %p224 = por %p222, %p223
      %p226 = scmp.ne.s32.totalorder %s211, %s225
      %p227 = scmp.eq.s32.totalorder %s30, 0
      %p228 = por %p226, %p227
      %s230 = sadd.s32 %s229, 1
      %p233 = scmp.eq.s32.totalorder %s24, 1
      %p234 = scmp.ne.s32.totalorder %s229, %s231
      %p235 = scmp.eq.s32.totalorder %s24, 0
      %p236 = por %p234, %p235
      %p237 = scmp.ne.s32.totalorder %s229, %s231
      %p238 = scmp.eq.s32.totalorder %s29, 1
      %p239 = por %p237, %p238
      %p240 = scmp.ne.s32.totalorder %s231, %s232
      %p241 = scmp.eq.s32.totalorder %s29, 0
      %p242 = por %p240, %p241
      %p243 = scmp.ne.s32.totalorder %s231, %s232
      %p244 = scmp.eq.s32.totalorder %s30, 1
      %p245 = por %p243, %p244
      %p247 = scmp.ne.s32.totalorder %s232, %s246
      %p248 = scmp.eq.s32.totalorder %s30, 0
      %p249 = por %p247, %p248
      %s251 = sadd.s32 %s250, 1
      %p254 = scmp.eq.s32.totalorder %s24, 1
      %p255 = scmp.ne.s32.totalorder %s250, %s252
      %p256 = scmp.eq.s32.totalorder %s24, 0
      %p257 = por %p255, %p256
      %p258 = scmp.ne.s32.totalorder %s250, %s252
      %p259 = scmp.eq.s32.totalorder %s29, 1
      %p260 = por %p258, %p259
      %p261 = scmp.ne.s32.totalorder %s252, %s253
      %p262 = scmp.eq.s32.totalorder %s29, 0
      %p263 = por %p261, %p262
      %p264 = scmp.ne.s32.totalorder %s252, %s253
      %p265 = scmp.eq.s32.totalorder %s30, 1
      %p266 = por %p264, %p265
      %p268 = scmp.ne.s32.totalorder %s253, %s267
      %p269 = scmp.eq.s32.totalorder %s30, 0
      %p270 = por %p268, %p269
      %s272 = sadd.s32 %s271, 1
      %p275 = scmp.eq.s32.totalorder %s24, 1
      %p276 = scmp.ne.s32.totalorder %s271, %s273
      %p277 = scmp.eq.s32.totalorder %s24, 0
      %p278 = por %p276, %p277
      %p279 = scmp.ne.s32.totalorder %s271, %s273
      %p280 = scmp.eq.s32.totalorder %s29, 1
      %p281 = por %p279, %p280
      %p282 = scmp.ne.s32.totalorder %s273, %s274
      %p283 = scmp.eq.s32.totalorder %s29, 0
      %p284 = por %p282, %p283
      %p285 = scmp.ne.s32.totalorder %s273, %s274
      %p286 = scmp.eq.s32.totalorder %s30, 1
      %p287 = por %p285, %p286
      %p289 = scmp.ne.s32.totalorder %s274, %s288
      %p290 = scmp.eq.s32.totalorder %s30, 0
      %p291 = por %p289, %p290
      %s293 = sadd.s32 %s292, 1
      %p296 = scmp.eq.s32.totalorder %s24, 1
      %p297 = scmp.ne.s32.totalorder %s292, %s294
      %p298 = scmp.eq.s32.totalorder %s24, 0
      %p299 = por %p297, %p298
      %p300 = scmp.ne.s32.totalorder %s292, %s294
      %p301 = scmp.eq.s32.totalorder %s29, 1
      %p302 = por %p300, %p301
      %p303 = scmp.ne.s32.totalorder %s294, %s295
      %p304 = scmp.eq.s32.totalorder %s29, 0
      %p305 = por %p303, %p304
      %p306 = scmp.ne.s32.totalorder %s294, %s295
      %p307 = scmp.eq.s32.totalorder %s30, 1
      %p308 = por %p306, %p307
      %p310 = scmp.ne.s32.totalorder %s295, %s309
      %p311 = scmp.eq.s32.totalorder %s30, 0
      %p312 = por %p310, %p311
      %s314 = sadd.s32 %s313, 1
      %p317 = scmp.eq.s32.totalorder %s24, 1
      %p318 = scmp.ne.s32.totalorder %s313, %s315
      %p319 = scmp.eq.s32.totalorder %s24, 0
      %p320 = por %p318, %p319
      %p321 = scmp.ne.s32.totalorder %s313, %s315
      %p322 = scmp.eq.s32.totalorder %s29, 1
      %p323 = por %p321, %p322
      %p324 = scmp.ne.s32.totalorder %s315, %s316
      %p325 = scmp.eq.s32.totalorder %s29, 0
      %p326 = por %p324, %p325
      %p327 = scmp.ne.s32.totalorder %s315, %s316
      %p328 = scmp.eq.s32.totalorder %s30, 1
      %p329 = por %p327, %p328
      %p331 = scmp.ne.s32.totalorder %s316, %s330
      %p332 = scmp.eq.s32.totalorder %s30, 0
      %p333 = por %p331, %p332
      %s335 = sadd.s32 %s334, 1
      %p338 = scmp.eq.s32.totalorder %s24, 1
      %p339 = scmp.ne.s32.totalorder %s334, %s336
      %p340 = scmp.eq.s32.totalorder %s24, 0
      %p341 = por %p339, %p340
      %p342 = scmp.ne.s32.totalorder %s334, %s336
      %p343 = scmp.eq.s32.totalorder %s29, 1
      %p344 = por %p342, %p343
      %p345 = scmp.ne.s32.totalorder %s336, %s337
      %p346 = scmp.eq.s32.totalorder %s29, 0
      %p347 = por %p345, %p346
      %p348 = scmp.ne.s32.totalorder %s336, %s337
      %p349 = scmp.eq.s32.totalorder %s30, 1
      %p350 = por %p348, %p349
      %p352 = scmp.ne.s32.totalorder %s337, %s351
      %p353 = scmp.eq.s32.totalorder %s30, 0
      %p354 = por %p352, %p353
      %s356 = sadd.s32 %s355, 1
      %p359 = scmp.eq.s32.totalorder %s24, 1
      %p360 = scmp.ne.s32.totalorder %s355, %s357
      %p361 = scmp.eq.s32.totalorder %s24, 0
      %p362 = por %p360, %p361
      %p363 = scmp.ne.s32.totalorder %s355, %s357
      %p364 = scmp.eq.s32.totalorder %s29, 1
      %p365 = por %p363, %p364
      %p366 = scmp.ne.s32.totalorder %s357, %s358
      %p367 = scmp.eq.s32.totalorder %s29, 0
      %p368 = por %p366, %p367
      %p369 = scmp.ne.s32.totalorder %s357, %s358
      %p370 = scmp.eq.s32.totalorder %s30, 1
      %p371 = por %p369, %p370
      %p373 = scmp.ne.s32.totalorder %s358, %s372
      %p374 = scmp.eq.s32.totalorder %s30, 0
      %p375 = por %p373, %p374
      %s376 = ssub.s32 %s31, %s43
      %s377 = ssub.s32 %s32, %s39
      %s378 = sor.u32 %s376, %s377
      %p379 = scmp.eq.s32.totalorder %s378, 0
      %s381 = sadd.s32 %s380, 1
      %s382 = scalar_select %p379, %s380, %s381
      %p385 = pneg %p379
      %p386 = scmp.eq.s32.totalorder %s24, 1
      %p387 = por %p385, %p386
      %p388 = scmp.ne.s32.totalorder %s380, %s383
      %p389 = scmp.eq.s32.totalorder %s24, 0
      %p390 = por %p388, %p389
      %p391 = scmp.ne.s32.totalorder %s380, %s383
      %p392 = scmp.eq.s32.totalorder %s29, 1
      %p393 = por %p391, %p392
      %p394 = scmp.ne.s32.totalorder %s383, %s384
      %p395 = scmp.eq.s32.totalorder %s29, 0
      %p396 = por %p394, %p395
      %p397 = scmp.ne.s32.totalorder %s383, %s384
      %p398 = scmp.eq.s32.totalorder %s30, 1
      %p399 = por %p397, %p398
      %p401 = scmp.ne.s32.totalorder %s384, %s400
      %p402 = scmp.eq.s32.totalorder %s30, 0
      %p403 = por %p401, %p402
      %p404 = scmp.le.s32.totalorder 1, %s24
      %p405 = scmp.lt.s32.totalorder %s24, 3
      %p406 = pnand %p404, %p405
      %p407 = pneg %p406
      // Predicated region
      $region9: #{tpu_custom_call.1} parent=5 // pred_check
        _
      $region10: #{tpu_custom_call.1} parent=5 // pred_check_branch
        %409 = sbr.rel (%p406) target = $region12
      $region11: #{tpu_custom_call.1} parent=5 // pred_region
        %s410 = ssub.s32 %s24, 1
        // Predicated region
        $region13: #{tpu_custom_call.1} parent=11 // pred_check
          %p411 = pneg %p137
        $region14: #{tpu_custom_call.1} parent=11 // pred_check_branch
          %413 = sbr.rel (%p411) target = $region16
        $region15: #{tpu_custom_call.1} parent=11 // pred_region
          _
        $region16: #{tpu_custom_call.1} parent=11 // pred_fallthru
          _
        // Predicated region
        $region17: #{tpu_custom_call.1} parent=11 // pred_check
          %p414 = pneg %p158
        $region18: #{tpu_custom_call.1} parent=11 // pred_check_branch
          %416 = sbr.rel (%p414) target = $region20
        $region19: #{tpu_custom_call.1} parent=11 // pred_region
          _
        $region20: #{tpu_custom_call.1} parent=11 // pred_fallthru
          _
        // Predicated region
        $region21: #{tpu_custom_call.1} parent=11 // pred_check
          %p417 = pneg %p179
        $region22: #{tpu_custom_call.1} parent=11 // pred_check_branch
          %419 = sbr.rel (%p417) target = $region24
        $region23: #{tpu_custom_call.1} parent=11 // pred_region
          _
        $region24: #{tpu_custom_call.1} parent=11 // pred_fallthru
          _
        // Predicated region
        $region25: #{tpu_custom_call.1} parent=11 // pred_check
          %p420 = pneg %p200
        $region26: #{tpu_custom_call.1} parent=11 // pred_check_branch
          %422 = sbr.rel (%p420) target = $region28
        $region27: #{tpu_custom_call.1} parent=11 // pred_region
          _
        $region28: #{tpu_custom_call.1} parent=11 // pred_fallthru
          _
        // Predicated region
        $region29: #{tpu_custom_call.1} parent=11 // pred_check
          %p423 = pneg %p221
        $region30: #{tpu_custom_call.1} parent=11 // pred_check_branch
          %425 = sbr.rel (%p423) target = $region32
        $region31: #{tpu_custom_call.1} parent=11 // pred_region
          _
        $region32: #{tpu_custom_call.1} parent=11 // pred_fallthru
          _
        // Predicated region
        $region33: #{tpu_custom_call.1} parent=11 // pred_check
          %p426 = pneg %p242
        $region34: #{tpu_custom_call.1} parent=11 // pred_check_branch
          %428 = sbr.rel (%p426) target = $region36
        $region35: #{tpu_custom_call.1} parent=11 // pred_region
          _
        $region36: #{tpu_custom_call.1} parent=11 // pred_fallthru
          _
        // Predicated region
        $region37: #{tpu_custom_call.1} parent=11 // pred_check
          %p429 = pneg %p263
        $region38: #{tpu_custom_call.1} parent=11 // pred_check_branch
          %431 = sbr.rel (%p429) target = $region40
        $region39: #{tpu_custom_call.1} parent=11 // pred_region
          _
        $region40: #{tpu_custom_call.1} parent=11 // pred_fallthru
          _
        // Predicated region
        $region41: #{tpu_custom_call.1} parent=11 // pred_check
          %p432 = pneg %p284
        $region42: #{tpu_custom_call.1} parent=11 // pred_check_branch
          %434 = sbr.rel (%p432) target = $region44
        $region43: #{tpu_custom_call.1} parent=11 // pred_region
          _
        $region44: #{tpu_custom_call.1} parent=11 // pred_fallthru
          _
        // Predicated region
        $region45: #{tpu_custom_call.1} parent=11 // pred_check
          %p435 = pneg %p305
        $region46: #{tpu_custom_call.1} parent=11 // pred_check_branch
          %437 = sbr.rel (%p435) target = $region48
        $region47: #{tpu_custom_call.1} parent=11 // pred_region
          _
        $region48: #{tpu_custom_call.1} parent=11 // pred_fallthru
          _
        // Predicated region
        $region49: #{tpu_custom_call.1} parent=11 // pred_check
          %p438 = pneg %p326
        $region50: #{tpu_custom_call.1} parent=11 // pred_check_branch
          %440 = sbr.rel (%p438) target = $region52
        $region51: #{tpu_custom_call.1} parent=11 // pred_region
          _
        $region52: #{tpu_custom_call.1} parent=11 // pred_fallthru
          _
        // Predicated region
        $region53: #{tpu_custom_call.1} parent=11 // pred_check
          %p441 = pneg %p347
        $region54: #{tpu_custom_call.1} parent=11 // pred_check_branch
          %443 = sbr.rel (%p441) target = $region56
        $region55: #{tpu_custom_call.1} parent=11 // pred_region
          _
        $region56: #{tpu_custom_call.1} parent=11 // pred_fallthru
          _
        // Predicated region
        $region57: #{tpu_custom_call.1} parent=11 // pred_check
          %p444 = pneg %p368
        $region58: #{tpu_custom_call.1} parent=11 // pred_check_branch
          %446 = sbr.rel (%p444) target = $region60
        $region59: #{tpu_custom_call.1} parent=11 // pred_region
          _
        $region60: #{tpu_custom_call.1} parent=11 // pred_fallthru
          _
      $region12: #{tpu_custom_call.1} parent=5 // pred_fallthru
        _
      %p447 = scmp.lt.s32.totalorder %s24, 2
      // Predicated region
      $region61: #{tpu_custom_call.1} parent=5 // pred_check
        %p448 = pneg %p447
      $region62: #{tpu_custom_call.1} parent=5 // pred_check_branch
        %450 = sbr.rel (%p448) target = $region64
      $region63: #{tpu_custom_call.1} parent=5 // pred_region
        // Predicated region
        $region65: #{tpu_custom_call.1} parent=63 // pred_check
          %p451 = pneg %p58
        $region66: #{tpu_custom_call.1} parent=63 // pred_check_branch
          %453 = sbr.rel (%p451) target = $region68
        $region67: #{tpu_custom_call.1} parent=63 // pred_region
          %p454 = scmp.lt.s32.totalorder %s31, 1
          %s455 = scalar_select %p454, %s31, 1
          %p456 = scmp.lt.s32.totalorder %s32, 0
          %s457 = scalar_select %p456, %s32, 0
          %s458 = sadd.s32 %s457, %s455
          %s459 = smul.addr %s458, 8
          %s460 = scalar_lea.vmem %s0, %s459
        $region68: #{tpu_custom_call.1} parent=63 // pred_fallthru
          _
        // Predicated region
        $region69: #{tpu_custom_call.1} parent=63 // pred_check
          %p461 = pneg %p84
        $region70: #{tpu_custom_call.1} parent=63 // pred_check_branch
          %463 = sbr.rel (%p461) target = $region72
        $region71: #{tpu_custom_call.1} parent=63 // pred_region
          %p464 = scmp.lt.s32.totalorder %s31, 1
          %s465 = scalar_select %p464, %s31, 1
          %s466 = smul.addr %s465, 4
          %s467 = smul.addr %s466, 4
          %s468 = scalar_lea.vmem %s1, %s467
        $region72: #{tpu_custom_call.1} parent=63 // pred_fallthru
          _
        // Predicated region
        $region73: #{tpu_custom_call.1} parent=63 // pred_check
          %p469 = pneg %p110
        $region74: #{tpu_custom_call.1} parent=63 // pred_check_branch
          %471 = sbr.rel (%p469) target = $region76
        $region75: #{tpu_custom_call.1} parent=63 // pred_region
          %p472 = scmp.lt.s32.totalorder %s31, 1
          %s473 = scalar_select %p472, %s31, 1
          %s474 = smul.addr %s473, 16
          %s475 = smul.addr %s474, 4
          %s476 = scalar_lea.vmem %s2, %s475
        $region76: #{tpu_custom_call.1} parent=63 // pred_fallthru
          _
      $region64: #{tpu_custom_call.1} parent=5 // pred_fallthru
        _
      %p477 = scmp.le.s32.totalorder 1, %s24
      %p478 = scmp.lt.s32.totalorder %s24, 3
      %p479 = pnand %p477, %p478
      %p480 = pneg %p479
      // Predicated region
      $region77: #{tpu_custom_call.1} parent=5 // pred_check
        _
      $region78: #{tpu_custom_call.1} parent=5 // pred_check_branch
        %482 = sbr.rel (%p479) target = $region80
      $region79: #{tpu_custom_call.1} parent=5 // pred_region
        %s483 = ssub.s32 %s24, 1
        %p484 = scmp.lt.s32.totalorder %s33, 1
        %s485 = scalar_select %p484, %s33, 1
        %p486 = scmp.lt.s32.totalorder %s34, 0
        %s487 = scalar_select %p486, %s34, 0
        %s488 = sadd.s32 %s487, %s485
        %s489 = smul.addr %s488, 8
        %s490 = scalar_lea.vmem %s0, %s489
        %p491 = pneg %p64
        %p492 = pneg %p61
        %p493 = scmp.lt.s32.totalorder %s33, 1
        %s494 = scalar_select %p493, %s33, 1
        %s495 = smul.addr %s494, 4
        %s496 = smul.addr %s495, 4
        %s497 = scalar_lea.vmem %s1, %s496
        %p498 = pneg %p90
        %p499 = pneg %p87
        %p500 = scmp.lt.s32.totalorder %s33, 1
        %s501 = scalar_select %p500, %s33, 1
        %s502 = smul.addr %s501, 16
        %s503 = smul.addr %s502, 4
        %s504 = scalar_lea.vmem %s2, %s503
        %p505 = pneg %p116
        %p506 = pneg %p113
        %p507 = pneg %p137
        %p508 = pneg %p134
        %p509 = pneg %p158
        %p510 = pneg %p155
        %p511 = pneg %p179
        %p512 = pneg %p176
        %p513 = pneg %p200
        %p514 = pneg %p197
        %p515 = pneg %p221
        %p516 = pneg %p218
        %p517 = pneg %p242
        %p518 = pneg %p239
        %p519 = pneg %p263
        %p520 = pneg %p260
        %p521 = pneg %p284
        %p522 = pneg %p281
        %p523 = pneg %p305
        %p524 = pneg %p302
        %p525 = pneg %p326
        %p526 = pneg %p323
        %p527 = pneg %p347
        %p528 = pneg %p344
        %p529 = pneg %p368
        %p530 = pneg %p365
        %p531 = pneg %p396
        %p532 = pneg %p393
        %s533 = sand.u32 %s383, 1
        %s534 = scalar_lea.sflag [#allocation4], %s533
        %s535 = sand.u32 %s383, 1
        %s536 = smul.addr %s535, 8
        %s537 = scalar_lea.vmem [#allocation3], %s536
        %p538 = scmp.lt.s32.totalorder %s33, 1
        %s539 = scalar_select %p538, %s33, 1
        %p540 = scmp.lt.s32.totalorder %s34, 0
        %s541 = scalar_select %p540, %s34, 0
        %s542 = sadd.s32 %s541, %s539
        %s543 = smul.addr %s542, 8
        %s544 = scalar_lea.vmem %s0, %s543
        %p545 = scmp.lt.s32.totalorder %s33, 1
        %s546 = scalar_select %p545, %s33, 1
        %s547 = smul.addr %s546, 4
        %s548 = smul.addr %s547, 4
        %s549 = scalar_lea.vmem %s1, %s548
        %p550 = scmp.lt.s32.totalorder %s33, 1
        %s551 = scalar_select %p550, %s33, 1
        %s552 = smul.addr %s551, 16
        %s553 = smul.addr %s552, 4
        %s554 = scalar_lea.vmem %s2, %s553
        %v556 = vld [vmem:[%s544] sm:$0xff]
        %v557 = vld [vmem:[%s3] sm:$0x1]
        %v558 = vld [vmem:[%s4] sm:$0x1]
        %vm559 = vcmask 261120
        %v560 = vsel %vm559, %v556, 0.0
        %561 = vadd.xlane.f32.xlu0 %v560
        %v562 = vpop.xlane.xlu0 %561
        %v563 = vrcp.pop 32.0
        %v564 = vmul.f32 %v562, %v563
        %v565 = vsub.f32 %v556, %v564
        %v566 = vmul.f32 %v565, %v565
        %v567 = vsel %vm559, %v566, 0.0
        %568 = vadd.xlane.f32.xlu0 %v567
        %v569 = vpop.xlane.xlu0 %568
        %v570 = vmul.f32 %v569, %v563
        %v571 = vadd.f32 %v570, 1e-05
        %v572 = vrsqrt.pop %v571
        %v573 = vmul.f32 %v565, %v572
        %v575 = vlaneseq
        %v576 = vshrl.u32 %v575, 7
        %v577 = vsub.s32 0, %v576
        %v578 = vrot.slane %v557, %v577
        %v580 = vmul.f32 %v573, %v578
        %v582 = vlaneseq
        %v583 = vshrl.u32 %v582, 7
        %v584 = vsub.s32 0, %v583
        %v585 = vrot.slane %v558, %v584
        %v587 = vadd.f32 %v580, %v585
        %v588 = vpack.c.bf16 %v587, %v587
        %v589 = vld [vmem:[%s5] sm:$0xf]
        %v590 = vld [vmem:[%s5 + $0x4] sm:$0xf]
        %v591 = vld [vmem:[%s5 + $0x8] sm:$0xf]
        %v592 = vld [vmem:[%s5 + $0xc] sm:$0xf]
        %v593 = vld [vmem:[%s6] sm:$0x1]
        %v595 = vlaneseq
        %v596 = vshrl.u32 %v595, 7
        %v597 = vsub.s32 0, %v596
        %v598 = vrot.slane %v593, %v597
        %v604 = vunpack.c.l.b16 %v589
        %v605 = vunpack.c.l.b16 %v590
        %v606 = vunpack.c.l.b16 %v591
        %v607 = vunpack.c.l.b16 %v592
        %v608 = vpack.c.b16 %v605, %v604
        %v609 = vpack.c.b16 %v607, %v606
        %v613 = vsel %vm559, %v588, 0
        %615 = vmatprep.subr.bf16.mxu0 0
        %616 = vmatpush1.bf16.msra.mxu0 0
        %617 = vmatprep.subr.bf16.mxu0 0
        %618 = vmatpush1.bf16.msra.mxu0 0
        %619 = vmatprep.subr.bf16.mxu0 0
        %620 = vmatpush1.bf16.msra.mxu0 0
        %621 = vmatprep.subr.bf16.mxu0 0
        %622 = vmatpush1.bf16.msra.mxu0 0
        %623 = vmatprep.subr.bf16.mxu0 0
        %624 = vmatpush1.bf16.msra.mxu0 0
        %625 = vmatprep.subr.bf16.mxu0 0
        %626 = vmatpush1.bf16.msra.mxu0 0
        %627 = vmatprep.subr.bf16.mxu0 0
        %628 = vmatpush1.bf16.msra.mxu0 %v609
        %629 = vmatprep.subr.bf16.mxu0 0
        %630 = vmatpush1.bf16.msra.mxu0 %v608
        %631 = vmatprep.subr.bf16.mxu0 0
        %632 = vmatpush2.bf16.msra.mxu0 0
        %633 = vmatprep.subr.bf16.mxu0 0
        %634 = vmatpush2.bf16.msra.mxu0 0
        %635 = vmatprep.subr.bf16.mxu0 0
        %636 = vmatpush2.bf16.msra.mxu0 0
        %637 = vmatprep.subr.bf16.mxu0 0
        %638 = vmatpush2.bf16.msra.mxu0 0
        %639 = vmatprep.subr.bf16.mxu0 0
        %640 = vmatpush2.bf16.msra.mxu0 0
        %641 = vmatprep.subr.bf16.mxu0 0
        %642 = vmatpush2.bf16.msra.mxu0 0
        %643 = vmatprep.subr.bf16.mxu0 0
        %644 = vmatpush2.bf16.msra.mxu0 0
        %645 = vmatprep.subr.bf16.mxu0 0
        %646 = vmatpush2.bf16.msra.mxu0 0
        %647 = vmatprep.mubr.bf16.mxu0 0
        %648 = vmatmul.mubr.bf16.gmra.mxu0 %v613
        %v649 = vpop.f32.mrf.mxu0
        %v650 = vadd.f32 %v598, %v649
        %v651 = vpop.f32.mrf.mxu0
        %v652 = vpop.f32.mrf.mxu0
        %v653 = vpop.f32.mrf.mxu0
        %654 = vdwg.mxu0
        %v655 = vpack.c.bf16 %v650, %v650
        %v656 = vld [vmem:[%s549] sm:$0xf]
        %v657 = vld [vmem:[%s549 + $0x4] sm:$0xf]
        %v658 = vld [vmem:[%s549 + $0x8] sm:$0xf]
        %v659 = vld [vmem:[%s549 + $0xc] sm:$0xf]
        %v660 = vld [vmem:[%s554] sm:$0xf]
        %v661 = vld [vmem:[%s554 + $0x4] sm:$0xf]
        %v662 = vld [vmem:[%s554 + $0x8] sm:$0xf]
        %v663 = vld [vmem:[%s554 + $0xc] sm:$0xf]
        %v664 = vld [vmem:[%s554 + $0x10] sm:$0xf]
        %v665 = vld [vmem:[%s554 + $0x14] sm:$0xf]
        %v666 = vld [vmem:[%s554 + $0x18] sm:$0xf]
        %v667 = vld [vmem:[%s554 + $0x1c] sm:$0xf]
        %v668 = vld [vmem:[%s554 + $0x20] sm:$0xf]
        %v669 = vld [vmem:[%s554 + $0x24] sm:$0xf]
        %v670 = vld [vmem:[%s554 + $0x28] sm:$0xf]
        %v671 = vld [vmem:[%s554 + $0x2c] sm:$0xf]
        %v672 = vld [vmem:[%s554 + $0x30] sm:$0xf]
        %v673 = vld [vmem:[%s554 + $0x34] sm:$0xf]
        %v674 = vld [vmem:[%s554 + $0x38] sm:$0xf]
        %v675 = vld [vmem:[%s554 + $0x3c] sm:$0xf]
        %v676 = vlaneseq
        %v677 = vand.u32 %v676, 127
        %vm678 = vcmp.lt.s32.totalorder %v677, 8
        %vm679 = vcmask 64512
        %v681 = vsel %vm679, %v655, 0
        %vm683 = vcmask 1043456
        %v685 = vsel %vm683, %v656, 0
        %687 = vmatprep.subr.bf16.mxu0 0
        %688 = vmatpush1.bf16.msra.mxu0 0
        %689 = vmatprep.subr.bf16.mxu0 0
        %690 = vmatpush1.bf16.msra.mxu0 0
        %691 = vmatprep.subr.bf16.mxu0 0
        %692 = vmatpush1.bf16.msra.mxu0 0
        %693 = vmatprep.subr.bf16.mxu0 0
        %694 = vmatpush1.bf16.msra.mxu0 0
        %695 = vmatprep.subr.bf16.mxu0 0
        %696 = vmatpush1.bf16.msra.mxu0 0
        %697 = vmatprep.subr.bf16.mxu0 0
        %698 = vmatpush1.bf16.msra.mxu0 0
        %699 = vmatprep.subr.bf16.mxu0 0
        %700 = vmatpush1.bf16.msra.mxu0 0
        %701 = vmatprep.subr.bf16.mxu0 0
        %702 = vmatpush1.bf16.msra.mxu0 %v685
        %703 = vmatprep.subr.bf16.mxu0 0
        %704 = vmatpush2.bf16.msra.mxu0 0
        %705 = vmatprep.subr.bf16.mxu0 0
        %706 = vmatpush2.bf16.msra.mxu0 0
        %707 = vmatprep.subr.bf16.mxu0 0
        %708 = vmatpush2.bf16.msra.mxu0 0
        %709 = vmatprep.subr.bf16.mxu0 0
        %710 = vmatpush2.bf16.msra.mxu0 0
        %711 = vmatprep.subr.bf16.mxu0 0
        %712 = vmatpush2.bf16.msra.mxu0 0
        %713 = vmatprep.subr.bf16.mxu0 0
        %714 = vmatpush2.bf16.msra.mxu0 0
        %715 = vmatprep.subr.bf16.mxu0 0
        %716 = vmatpush2.bf16.msra.mxu0 0
        %717 = vmatprep.subr.bf16.mxu0 0
        %718 = vmatpush2.bf16.msra.mxu0 0
        %719 = vmatprep.mubr.bf16.mxu0 0
        %720 = vmatmul.mubr.bf16.gmra.mxu0 %v681
        %v721 = vpop.f32.mrf.mxu0
        %v722 = vadd.f32 0.0, %v721
        %v723 = vpop.f32.mrf.mxu0
        %v724 = vpop.f32.mrf.mxu0
        %v725 = vpop.f32.mrf.mxu0
        %726 = vdwg.mxu0
        %v727 = vsel %vm678, 1, 0
        %vm728 = vcmp.eq.s32.totalorder %v727, 1
        %v729 = vsel %vm728, %v722, -1e+30
        %730 = vmax.xlane.f32.xlu0 %v729
        %v731 = vpop.xlane.xlu0 %730
        %v732 = vsub.f32 %v729, %v731
        %v733 = vmul.f32 %v732, 1.442695
        %v734 = vpow.pop %v733
        %735 = vadd.xlane.f32.xlu0 %v734
        %v736 = vpop.xlane.xlu0 %735
        %v737 = vrcp.pop %v736
        %v738 = vmul.f32 %v734, %v737
        %v739 = vpack.c.bf16 %v738, %v738
        %v756 = vunpack.c.l.b16 %v660
        %v757 = vunpack.c.l.b16 %v661
        %v758 = vunpack.c.l.b16 %v662
        %v759 = vunpack.c.l.b16 %v663
        %v760 = vunpack.c.l.b16 %v664
        %v761 = vunpack.c.l.b16 %v665
        %v762 = vunpack.c.l.b16 %v666
        %v763 = vunpack.c.l.b16 %v667
        %v764 = vunpack.c.l.b16 %v668
        %v765 = vunpack.c.l.b16 %v669
        %v766 = vunpack.c.l.b16 %v670
        %v767 = vunpack.c.l.b16 %v671
        %v768 = vunpack.c.l.b16 %v672
        %v769 = vunpack.c.l.b16 %v673
        %v770 = vunpack.c.l.b16 %v674
        %v771 = vunpack.c.l.b16 %v675
        %v772 = vpack.c.b16 %v757, %v756
        %v773 = vpack.c.b16 %v759, %v758
        %v774 = vpack.c.b16 %v761, %v760
        %v775 = vpack.c.b16 %v763, %v762
        %v776 = vpack.c.b16 %v765, %v764
        %v777 = vpack.c.b16 %v767, %v766
        %v778 = vpack.c.b16 %v769, %v768
        %v779 = vpack.c.b16 %v771, %v770
        %788 = vmatprep.subr.bf16.mxu0 0
        %789 = vmatpush1.bf16.msra.mxu0 %v779
        %790 = vmatprep.subr.bf16.mxu0 0
        %791 = vmatpush1.bf16.msra.mxu0 %v778
        %792 = vmatprep.subr.bf16.mxu0 0
        %793 = vmatpush1.bf16.msra.mxu0 %v777
        %794 = vmatprep.subr.bf16.mxu0 0
        %795 = vmatpush1.bf16.msra.mxu0 %v776
        %796 = vmatprep.subr.bf16.mxu0 0
        %797 = vmatpush1.bf16.msra.mxu0 %v775
        %798 = vmatprep.subr.bf16.mxu0 0
        %799 = vmatpush1.bf16.msra.mxu0 %v774
        %800 = vmatprep.subr.bf16.mxu0 0
        %801 = vmatpush1.bf16.msra.mxu0 %v773
        %802 = vmatprep.subr.bf16.mxu0 0
        %803 = vmatpush1.bf16.msra.mxu0 %v772
        %804 = vmatprep.subr.bf16.mxu0 0
        %805 = vmatpush2.bf16.msra.mxu0 0
        %806 = vmatprep.subr.bf16.mxu0 0
        %807 = vmatpush2.bf16.msra.mxu0 0
        %808 = vmatprep.subr.bf16.mxu0 0
        %809 = vmatpush2.bf16.msra.mxu0 0
        %810 = vmatprep.subr.bf16.mxu0 0
        %811 = vmatpush2.bf16.msra.mxu0 0
        %812 = vmatprep.subr.bf16.mxu0 0
        %813 = vmatpush2.bf16.msra.mxu0 0
        %814 = vmatprep.subr.bf16.mxu0 0
        %815 = vmatpush2.bf16.msra.mxu0 0
        %816 = vmatprep.subr.bf16.mxu0 0
        %817 = vmatpush2.bf16.msra.mxu0 0
        %818 = vmatprep.subr.bf16.mxu0 0
        %819 = vmatpush2.bf16.msra.mxu0 0
        %820 = vmatprep.mubr.bf16.mxu0 0
        %821 = vmatmul.mubr.bf16.gmra.mxu0 %v739
        %v822 = vpop.f32.mrf.mxu0
        %v823 = vadd.f32 0.0, %v822
        %v824 = vpop.f32.mrf.mxu0
        %v825 = vpop.f32.mrf.mxu0
        %v826 = vpop.f32.mrf.mxu0
        %827 = vdwg.mxu0
        %v828 = vpack.c.bf16 %v823, %v823
        %vm829 = vcmask 60416
        %830 = vst.msk [vmem:[#allocation2] sm:$0xf] %vm829, %v828
        %832 = vrot.lane.b32.xlu0 %v655, 120
        %v833 = vpop.permute.xlu0 %832
        %v835 = vsel %vm679, %v833, 0
        %v838 = vsel %vm683, %v657, 0
        %840 = vmatprep.subr.bf16.mxu0 0
        %841 = vmatpush1.bf16.msra.mxu0 0
        %842 = vmatprep.subr.bf16.mxu0 0
        %843 = vmatpush1.bf16.msra.mxu0 0
        %844 = vmatprep.subr.bf16.mxu0 0
        %845 = vmatpush1.bf16.msra.mxu0 0
        %846 = vmatprep.subr.bf16.mxu0 0
        %847 = vmatpush1.bf16.msra.mxu0 0
        %848 = vmatprep.subr.bf16.mxu0 0
        %849 = vmatpush1.bf16.msra.mxu0 0
        %850 = vmatprep.subr.bf16.mxu0 0
        %851 = vmatpush1.bf16.msra.mxu0 0
        %852 = vmatprep.subr.bf16.mxu0 0
        %853 = vmatpush1.bf16.msra.mxu0 0
        %854 = vmatprep.subr.bf16.mxu0 0
        %855 = vmatpush1.bf16.msra.mxu0 %v838
        %856 = vmatprep.subr.bf16.mxu0 0
        %857 = vmatpush2.bf16.msra.mxu0 0
        %858 = vmatprep.subr.bf16.mxu0 0
        %859 = vmatpush2.bf16.msra.mxu0 0
        %860 = vmatprep.subr.bf16.mxu0 0
        %861 = vmatpush2.bf16.msra.mxu0 0
        %862 = vmatprep.subr.bf16.mxu0 0
        %863 = vmatpush2.bf16.msra.mxu0 0
        %864 = vmatprep.subr.bf16.mxu0 0
        %865 = vmatpush2.bf16.msra.mxu0 0
        %866 = vmatprep.subr.bf16.mxu0 0
        %867 = vmatpush2.bf16.msra.mxu0 0
        %868 = vmatprep.subr.bf16.mxu0 0
        %869 = vmatpush2.bf16.msra.mxu0 0
        %870 = vmatprep.subr.bf16.mxu0 0
        %871 = vmatpush2.bf16.msra.mxu0 0
        %872 = vmatprep.mubr.bf16.mxu0 0
        %873 = vmatmul.mubr.bf16.gmra.mxu0 %v835
        %v874 = vpop.f32.mrf.mxu0
        %v875 = vadd.f32 0.0, %v874
        %v876 = vpop.f32.mrf.mxu0
        %v877 = vpop.f32.mrf.mxu0
        %v878 = vpop.f32.mrf.mxu0
        %879 = vdwg.mxu0
        %v880 = vsel %vm728, %v875, -1e+30
        %881 = vmax.xlane.f32.xlu0 %v880
        %v882 = vpop.xlane.xlu0 %881
        %v883 = vsub.f32 %v880, %v882
        %v884 = vmul.f32 %v883, 1.442695
        %v885 = vpow.pop %v884
        %886 = vadd.xlane.f32.xlu0 %v885
        %v887 = vpop.xlane.xlu0 %886
        %v888 = vrcp.pop %v887
        %v889 = vmul.f32 %v885, %v888
        %v890 = vpack.c.bf16 %v889, %v889
        %891 = vrot.lane.b32.xlu0 %v772, 120
        %v892 = vpop.permute.xlu0 %891
        %893 = vrot.lane.b32.xlu0 %v773, 120
        %v894 = vpop.permute.xlu0 %893
        %895 = vrot.lane.b32.xlu0 %v774, 120
        %v896 = vpop.permute.xlu0 %895
        %897 = vrot.lane.b32.xlu0 %v775, 120
        %v898 = vpop.permute.xlu0 %897
        %899 = vrot.lane.b32.xlu0 %v776, 120
        %v900 = vpop.permute.xlu0 %899
        %901 = vrot.lane.b32.xlu0 %v777, 120
        %v902 = vpop.permute.xlu0 %901
        %903 = vrot.lane.b32.xlu0 %v778, 120
        %v904 = vpop.permute.xlu0 %903
        %905 = vrot.lane.b32.xlu0 %v779, 120
        %v906 = vpop.permute.xlu0 %905
        %915 = vmatprep.subr.bf16.mxu0 0
        %916 = vmatpush1.bf16.msra.mxu0 %v906
        %917 = vmatprep.subr.bf16.mxu0 0
        %918 = vmatpush1.bf16.msra.mxu0 %v904
        %919 = vmatprep.subr.bf16.mxu0 0
        %920 = vmatpush1.bf16.msra.mxu0 %v902
        %921 = vmatprep.subr.bf16.mxu0 0
        %922 = vmatpush1.bf16.msra.mxu0 %v900
        %923 = vmatprep.subr.bf16.mxu0 0
        %924 = vmatpush1.bf16.msra.mxu0 %v898
        %925 = vmatprep.subr.bf16.mxu0 0
        %926 = vmatpush1.bf16.msra.mxu0 %v896
        %927 = vmatprep.subr.bf16.mxu0 0
        %928 = vmatpush1.bf16.msra.mxu0 %v894
        %929 = vmatprep.subr.bf16.mxu0 0
        %930 = vmatpush1.bf16.msra.mxu0 %v892
        %931 = vmatprep.subr.bf16.mxu0 0
        %932 = vmatpush2.bf16.msra.mxu0 0
        %933 = vmatprep.subr.bf16.mxu0 0
        %934 = vmatpush2.bf16.msra.mxu0 0
        %935 = vmatprep.subr.bf16.mxu0 0
        %936 = vmatpush2.bf16.msra.mxu0 0
        %937 = vmatprep.subr.bf16.mxu0 0
        %938 = vmatpush2.bf16.msra.mxu0 0
        %939 = vmatprep.subr.bf16.mxu0 0
        %940 = vmatpush2.bf16.msra.mxu0 0
        %941 = vmatprep.subr.bf16.mxu0 0
        %942 = vmatpush2.bf16.msra.mxu0 0
        %943 = vmatprep.subr.bf16.mxu0 0
        %944 = vmatpush2.bf16.msra.mxu0 0
        %945 = vmatprep.subr.bf16.mxu0 0
        %946 = vmatpush2.bf16.msra.mxu0 0
        %947 = vmatprep.mubr.bf16.mxu0 0
        %948 = vmatmul.mubr.bf16.gmra.mxu0 %v890
        %v949 = vpop.f32.mrf.mxu0
        %v950 = vadd.f32 0.0, %v949
        %v951 = vpop.f32.mrf.mxu0
        %v952 = vpop.f32.mrf.mxu0
        %v953 = vpop.f32.mrf.mxu0
        %954 = vdwg.mxu0
        %v955 = vpack.c.bf16 %v950, %v950
        %v957 = vunpack.c.l.b16 %v955
        %v958 = vpack.c.b16 %v957, %v957
        %959 = vrot.lane.b32.xlu0 %v958, 8
        %v960 = vpop.permute.xlu0 %959
        %vm962 = vcmask 126016
        %963 = vst.msk [vmem:[#allocation2] sm:$0xf] %vm962, %v960
        %964 = vrot.lane.b32.xlu0 %v655, 112
        %v965 = vpop.permute.xlu0 %964
        %v967 = vsel %vm679, %v965, 0
        %v970 = vsel %vm683, %v658, 0
        %972 = vmatprep.subr.bf16.mxu0 0
        %973 = vmatpush1.bf16.msra.mxu0 0
        %974 = vmatprep.subr.bf16.mxu0 0
        %975 = vmatpush1.bf16.msra.mxu0 0
        %976 = vmatprep.subr.bf16.mxu0 0
        %977 = vmatpush1.bf16.msra.mxu0 0
        %978 = vmatprep.subr.bf16.mxu0 0
        %979 = vmatpush1.bf16.msra.mxu0 0
        %980 = vmatprep.subr.bf16.mxu0 0
        %981 = vmatpush1.bf16.msra.mxu0 0
        %982 = vmatprep.subr.bf16.mxu0 0
        %983 = vmatpush1.bf16.msra.mxu0 0
        %984 = vmatprep.subr.bf16.mxu0 0
        %985 = vmatpush1.bf16.msra.mxu0 0
        %986 = vmatprep.subr.bf16.mxu0 0
        %987 = vmatpush1.bf16.msra.mxu0 %v970
        %988 = vmatprep.subr.bf16.mxu0 0
        %989 = vmatpush2.bf16.msra.mxu0 0
        %990 = vmatprep.subr.bf16.mxu0 0
        %991 = vmatpush2.bf16.msra.mxu0 0
        %992 = vmatprep.subr.bf16.mxu0 0
        %993 = vmatpush2.bf16.msra.mxu0 0
        %994 = vmatprep.subr.bf16.mxu0 0
        %995 = vmatpush2.bf16.msra.mxu0 0
        %996 = vmatprep.subr.bf16.mxu0 0
        %997 = vmatpush2.bf16.msra.mxu0 0
        %998 = vmatprep.subr.bf16.mxu0 0
        %999 = vmatpush2.bf16.msra.mxu0 0
        %1000 = vmatprep.subr.bf16.mxu0 0
        %1001 = vmatpush2.bf16.msra.mxu0 0
        %1002 = vmatprep.subr.bf16.mxu0 0
        %1003 = vmatpush2.bf16.msra.mxu0 0
        %1004 = vmatprep.mubr.bf16.mxu0 0
        %1005 = vmatmul.mubr.bf16.gmra.mxu0 %v967
        %v1006 = vpop.f32.mrf.mxu0
        %v1007 = vadd.f32 0.0, %v1006
        %v1008 = vpop.f32.mrf.mxu0
        %v1009 = vpop.f32.mrf.mxu0
        %v1010 = vpop.f32.mrf.mxu0
        %1011 = vdwg.mxu0
        %v1012 = vsel %vm728, %v1007, -1e+30
        %1013 = vmax.xlane.f32.xlu0 %v1012
        %v1014 = vpop.xlane.xlu0 %1013
        %v1015 = vsub.f32 %v1012, %v1014
        %v1016 = vmul.f32 %v1015, 1.442695
        %v1017 = vpow.pop %v1016
        %1018 = vadd.xlane.f32.xlu0 %v1017
        %v1019 = vpop.xlane.xlu0 %1018
        %v1020 = vrcp.pop %v1019
        %v1021 = vmul.f32 %v1017, %v1020
        %v1022 = vpack.c.bf16 %v1021, %v1021
        %1023 = vrot.lane.b32.xlu0 %v772, 112
        %v1024 = vpop.permute.xlu0 %1023
        %1025 = vrot.lane.b32.xlu0 %v773, 112
        %v1026 = vpop.permute.xlu0 %1025
        %1027 = vrot.lane.b32.xlu0 %v774, 112
        %v1028 = vpop.permute.xlu0 %1027
        %1029 = vrot.lane.b32.xlu0 %v775, 112
        %v1030 = vpop.permute.xlu0 %1029
        %1031 = vrot.lane.b32.xlu0 %v776, 112
        %v1032 = vpop.permute.xlu0 %1031
        %1033 = vrot.lane.b32.xlu0 %v777, 112
        %v1034 = vpop.permute.xlu0 %1033
        %1035 = vrot.lane.b32.xlu0 %v778, 112
        %v1036 = vpop.permute.xlu0 %1035
        %1037 = vrot.lane.b32.xlu0 %v779, 112
        %v1038 = vpop.permute.xlu0 %1037
        %1047 = vmatprep.subr.bf16.mxu0 0
        %1048 = vmatpush1.bf16.msra.mxu0 %v1038
        %1049 = vmatprep.subr.bf16.mxu0 0
        %1050 = vmatpush1.bf16.msra.mxu0 %v1036
        %1051 = vmatprep.subr.bf16.mxu0 0
        %1052 = vmatpush1.bf16.msra.mxu0 %v1034
        %1053 = vmatprep.subr.bf16.mxu0 0
        %1054 = vmatpush1.bf16.msra.mxu0 %v1032
        %1055 = vmatprep.subr.bf16.mxu0 0
        %1056 = vmatpush1.bf16.msra.mxu0 %v1030
        %1057 = vmatprep.subr.bf16.mxu0 0
        %1058 = vmatpush1.bf16.msra.mxu0 %v1028
        %1059 = vmatprep.subr.bf16.mxu0 0
        %1060 = vmatpush1.bf16.msra.mxu0 %v1026
        %1061 = vmatprep.subr.bf16.mxu0 0
        %1062 = vmatpush1.bf16.msra.mxu0 %v1024
        %1063 = vmatprep.subr.bf16.mxu0 0
        %1064 = vmatpush2.bf16.msra.mxu0 0
        %1065 = vmatprep.subr.bf16.mxu0 0
        %1066 = vmatpush2.bf16.msra.mxu0 0
        %1067 = vmatprep.subr.bf16.mxu0 0
        %1068 = vmatpush2.bf16.msra.mxu0 0
        %1069 = vmatprep.subr.bf16.mxu0 0
        %1070 = vmatpush2.bf16.msra.mxu0 0
        %1071 = vmatprep.subr.bf16.mxu0 0
        %1072 = vmatpush2.bf16.msra.mxu0 0
        %1073 = vmatprep.subr.bf16.mxu0 0
        %1074 = vmatpush2.bf16.msra.mxu0 0
        %1075 = vmatprep.subr.bf16.mxu0 0
        %1076 = vmatpush2.bf16.msra.mxu0 0
        %1077 = vmatprep.subr.bf16.mxu0 0
        %1078 = vmatpush2.bf16.msra.mxu0 0
        %1079 = vmatprep.mubr.bf16.mxu0 0
        %1080 = vmatmul.mubr.bf16.gmra.mxu0 %v1022
        %v1081 = vpop.f32.mrf.mxu0
        %v1082 = vadd.f32 0.0, %v1081
        %v1083 = vpop.f32.mrf.mxu0
        %v1084 = vpop.f32.mrf.mxu0
        %v1085 = vpop.f32.mrf.mxu0
        %1086 = vdwg.mxu0
        %v1087 = vpack.c.bf16 %v1082, %v1082
        %v1089 = vunpack.c.l.b16 %v1087
        %v1090 = vpack.c.b16 %v1089, %v1089
        %1091 = vrot.lane.b32.xlu0 %v1090, 16
        %v1092 = vpop.permute.xlu0 %1091
        %vm1094 = vcmask 191616
        %1095 = vst.msk [vmem:[#allocation2] sm:$0xf] %vm1094, %v1092
        %1096 = vrot.lane.b32.xlu0 %v655, 104
        %v1097 = vpop.permute.xlu0 %1096
        %v1099 = vsel %vm679, %v1097, 0
        %v1102 = vsel %vm683, %v659, 0
        %1104 = vmatprep.subr.bf16.mxu0 0
        %1105 = vmatpush1.bf16.msra.mxu0 0
        %1106 = vmatprep.subr.bf16.mxu0 0
        %1107 = vmatpush1.bf16.msra.mxu0 0
        %1108 = vmatprep.subr.bf16.mxu0 0
        %1109 = vmatpush1.bf16.msra.mxu0 0
        %1110 = vmatprep.subr.bf16.mxu0 0
        %1111 = vmatpush1.bf16.msra.mxu0 0
        %1112 = vmatprep.subr.bf16.mxu0 0
        %1113 = vmatpush1.bf16.msra.mxu0 0
        %1114 = vmatprep.subr.bf16.mxu0 0
        %1115 = vmatpush1.bf16.msra.mxu0 0
        %1116 = vmatprep.subr.bf16.mxu0 0
        %1117 = vmatpush1.bf16.msra.mxu0 0
        %1118 = vmatprep.subr.bf16.mxu0 0
        %1119 = vmatpush1.bf16.msra.mxu0 %v1102
        %1120 = vmatprep.subr.bf16.mxu0 0
        %1121 = vmatpush2.bf16.msra.mxu0 0
        %1122 = vmatprep.subr.bf16.mxu0 0
        %1123 = vmatpush2.bf16.msra.mxu0 0
        %1124 = vmatprep.subr.bf16.mxu0 0
        %1125 = vmatpush2.bf16.msra.mxu0 0
        %1126 = vmatprep.subr.bf16.mxu0 0
        %1127 = vmatpush2.bf16.msra.mxu0 0
        %1128 = vmatprep.subr.bf16.mxu0 0
        %1129 = vmatpush2.bf16.msra.mxu0 0
        %1130 = vmatprep.subr.bf16.mxu0 0
        %1131 = vmatpush2.bf16.msra.mxu0 0
        %1132 = vmatprep.subr.bf16.mxu0 0
        %1133 = vmatpush2.bf16.msra.mxu0 0
        %1134 = vmatprep.subr.bf16.mxu0 0
        %1135 = vmatpush2.bf16.msra.mxu0 0
        %1136 = vmatprep.mubr.bf16.mxu0 0
        %1137 = vmatmul.mubr.bf16.gmra.mxu0 %v1099
        %v1138 = vpop.f32.mrf.mxu0
        %v1139 = vadd.f32 0.0, %v1138
        %v1140 = vpop.f32.mrf.mxu0
        %v1141 = vpop.f32.mrf.mxu0
        %v1142 = vpop.f32.mrf.mxu0
        %1143 = vdwg.mxu0
        %v1144 = vsel %vm728, %v1139, -1e+30
        %1145 = vmax.xlane.f32.xlu0 %v1144
        %v1146 = vpop.xlane.xlu0 %1145
        %v1147 = vsub.f32 %v1144, %v1146
        %v1148 = vmul.f32 %v1147, 1.442695
        %v1149 = vpow.pop %v1148
        %1150 = vadd.xlane.f32.xlu0 %v1149
        %v1151 = vpop.xlane.xlu0 %1150
        %v1152 = vrcp.pop %v1151
        %v1153 = vmul.f32 %v1149, %v1152
        %v1154 = vpack.c.bf16 %v1153, %v1153
        %1155 = vrot.lane.b32.xlu0 %v772, 104
        %v1156 = vpop.permute.xlu0 %1155
        %1157 = vrot.lane.b32.xlu0 %v773, 104
        %v1158 = vpop.permute.xlu0 %1157
        %1159 = vrot.lane.b32.xlu0 %v774, 104
        %v1160 = vpop.permute.xlu0 %1159
        %1161 = vrot.lane.b32.xlu0 %v775, 104
        %v1162 = vpop.permute.xlu0 %1161
        %1163 = vrot.lane.b32.xlu0 %v776, 104
        %v1164 = vpop.permute.xlu0 %1163
        %1165 = vrot.lane.b32.xlu0 %v777, 104
        %v1166 = vpop.permute.xlu0 %1165
        %1167 = vrot.lane.b32.xlu0 %v778, 104
        %v1168 = vpop.permute.xlu0 %1167
        %1169 = vrot.lane.b32.xlu0 %v779, 104
        %v1170 = vpop.permute.xlu0 %1169
        %1179 = vmatprep.subr.bf16.mxu0 0
        %1180 = vmatpush1.bf16.msra.mxu0 %v1170
        %1181 = vmatprep.subr.bf16.mxu0 0
        %1182 = vmatpush1.bf16.msra.mxu0 %v1168
        %1183 = vmatprep.subr.bf16.mxu0 0
        %1184 = vmatpush1.bf16.msra.mxu0 %v1166
        %1185 = vmatprep.subr.bf16.mxu0 0
        %1186 = vmatpush1.bf16.msra.mxu0 %v1164
        %1187 = vmatprep.subr.bf16.mxu0 0
        %1188 = vmatpush1.bf16.msra.mxu0 %v1162
        %1189 = vmatprep.subr.bf16.mxu0 0
        %1190 = vmatpush1.bf16.msra.mxu0 %v1160
        %1191 = vmatprep.subr.bf16.mxu0 0
        %1192 = vmatpush1.bf16.msra.mxu0 %v1158
        %1193 = vmatprep.subr.bf16.mxu0 0
        %1194 = vmatpush1.bf16.msra.mxu0 %v1156
        %1195 = vmatprep.subr.bf16.mxu0 0
        %1196 = vmatpush2.bf16.msra.mxu0 0
        %1197 = vmatprep.subr.bf16.mxu0 0
        %1198 = vmatpush2.bf16.msra.mxu0 0
        %1199 = vmatprep.subr.bf16.mxu0 0
        %1200 = vmatpush2.bf16.msra.mxu0 0
        %1201 = vmatprep.subr.bf16.mxu0 0
        %1202 = vmatpush2.bf16.msra.mxu0 0
        %1203 = vmatprep.subr.bf16.mxu0 0
        %1204 = vmatpush2.bf16.msra.mxu0 0
        %1205 = vmatprep.subr.bf16.mxu0 0
        %1206 = vmatpush2.bf16.msra.mxu0 0
        %1207 = vmatprep.subr.bf16.mxu0 0
        %1208 = vmatpush2.bf16.msra.mxu0 0
        %1209 = vmatprep.subr.bf16.mxu0 0
        %1210 = vmatpush2.bf16.msra.mxu0 0
        %1211 = vmatprep.mubr.bf16.mxu0 0
        %1212 = vmatmul.mubr.bf16.gmra.mxu0 %v1154
        %v1213 = vpop.f32.mrf.mxu0
        %v1214 = vadd.f32 0.0, %v1213
        %v1215 = vpop.f32.mrf.mxu0
        %v1216 = vpop.f32.mrf.mxu0
        %v1217 = vpop.f32.mrf.mxu0
        %1218 = vdwg.mxu0
        %v1219 = vpack.c.bf16 %v1214, %v1214
        %v1221 = vunpack.c.l.b16 %v1219
        %v1222 = vpack.c.b16 %v1221, %v1221
        %1223 = vrot.lane.b32.xlu0 %v1222, 24
        %v1224 = vpop.permute.xlu0 %1223
        %vm1226 = vcmask 257216
        %1227 = vst.msk [vmem:[#allocation2] sm:$0xf] %vm1226, %v1224
        %v1228 = vld [vmem:[#allocation2] sm:$0xf]
        %v1229 = vld [vmem:[%s7] sm:$0xf]
        %v1230 = vld [vmem:[%s7 + $0x4] sm:$0xf]
        %v1231 = vld [vmem:[%s7 + $0x8] sm:$0xf]
        %v1232 = vld [vmem:[%s7 + $0xc] sm:$0xf]
        %v1233 = vld [vmem:[%s8] sm:$0x1]
        %v1235 = vlaneseq
        %v1236 = vshrl.u32 %v1235, 7
        %v1237 = vsub.s32 0, %v1236
        %v1238 = vrot.slane %v1233, %v1237
        %v1244 = vunpack.c.l.b16 %v1229
        %v1245 = vunpack.c.l.b16 %v1230
        %v1246 = vunpack.c.l.b16 %v1231
        %v1247 = vunpack.c.l.b16 %v1232
        %v1248 = vpack.c.b16 %v1245, %v1244
        %v1249 = vpack.c.b16 %v1247, %v1246
        %v1253 = vsel %vm559, %v1228, 0
        %1255 = vmatprep.subr.bf16.mxu0 0
        %1256 = vmatpush1.bf16.msra.mxu0 0
        %1257 = vmatprep.subr.bf16.mxu0 0
        %1258 = vmatpush1.bf16.msra.mxu0 0
        %1259 = vmatprep.subr.bf16.mxu0 0
        %1260 = vmatpush1.bf16.msra.mxu0 0
        %1261 = vmatprep.subr.bf16.mxu0 0
        %1262 = vmatpush1.bf16.msra.mxu0 0
        %1263 = vmatprep.subr.bf16.mxu0 0
        %1264 = vmatpush1.bf16.msra.mxu0 0
        %1265 = vmatprep.subr.bf16.mxu0 0
        %1266 = vmatpush1.bf16.msra.mxu0 0
        %1267 = vmatprep.subr.bf16.mxu0 0
        %1268 = vmatpush1.bf16.msra.mxu0 %v1249
        %1269 = vmatprep.subr.bf16.mxu0 0
        %1270 = vmatpush1.bf16.msra.mxu0 %v1248
        %1271 = vmatprep.subr.bf16.mxu0 0
        %1272 = vmatpush2.bf16.msra.mxu0 0
        %1273 = vmatprep.subr.bf16.mxu0 0
        %1274 = vmatpush2.bf16.msra.mxu0 0
        %1275 = vmatprep.subr.bf16.mxu0 0
        %1276 = vmatpush2.bf16.msra.mxu0 0
        %1277 = vmatprep.subr.bf16.mxu0 0
        %1278 = vmatpush2.bf16.msra.mxu0 0
        %1279 = vmatprep.subr.bf16.mxu0 0
        %1280 = vmatpush2.bf16.msra.mxu0 0
        %1281 = vmatprep.subr.bf16.mxu0 0
        %1282 = vmatpush2.bf16.msra.mxu0 0
        %1283 = vmatprep.subr.bf16.mxu0 0
        %1284 = vmatpush2.bf16.msra.mxu0 0
        %1285 = vmatprep.subr.bf16.mxu0 0
        %1286 = vmatpush2.bf16.msra.mxu0 0
        %1287 = vmatprep.mubr.bf16.mxu0 0
        %1288 = vmatmul.mubr.bf16.gmra.mxu0 %v1253
        %v1289 = vpop.f32.mrf.mxu0
        %v1290 = vadd.f32 %v1238, %v1289
        %v1291 = vpop.f32.mrf.mxu0
        %v1292 = vpop.f32.mrf.mxu0
        %v1293 = vpop.f32.mrf.mxu0
        %1294 = vdwg.mxu0
        %v1295 = vadd.f32 %v556, %v1290
        %v1296 = vld [vmem:[%s9] sm:$0x1]
        %v1297 = vld [vmem:[%s10] sm:$0x1]
        %v1298 = vsel %vm559, %v1295, 0.0
        %1299 = vadd.xlane.f32.xlu0 %v1298
        %v1300 = vpop.xlane.xlu0 %1299
        %v1301 = vmul.f32 %v1300, %v563
        %v1302 = vsub.f32 %v1295, %v1301
        %v1303 = vmul.f32 %v1302, %v1302
        %v1304 = vsel %vm559, %v1303, 0.0
        %1305 = vadd.xlane.f32.xlu0 %v1304
        %v1306 = vpop.xlane.xlu0 %1305
        %v1307 = vmul.f32 %v1306, %v563
        %v1308 = vadd.f32 %v1307, 1e-05
        %v1309 = vrsqrt.pop %v1308
        %v1310 = vmul.f32 %v1302, %v1309
        %v1312 = vlaneseq
        %v1313 = vshrl.u32 %v1312, 7
        %v1314 = vsub.s32 0, %v1313
        %v1315 = vrot.slane %v1296, %v1314
        %v1317 = vmul.f32 %v1310, %v1315
        %v1319 = vlaneseq
        %v1320 = vshrl.u32 %v1319, 7
        %v1321 = vsub.s32 0, %v1320
        %v1322 = vrot.slane %v1297, %v1321
        %v1324 = vadd.f32 %v1317, %v1322
        %v1325 = vpack.c.bf16 %v1324, %v1324
        %v1326 = vld [vmem:[%s11] sm:$0xf]
        %v1327 = vld [vmem:[%s11 + $0x4] sm:$0xf]
        %v1328 = vld [vmem:[%s11 + $0x8] sm:$0xf]
        %v1329 = vld [vmem:[%s11 + $0xc] sm:$0xf]
        %v1330 = vld [vmem:[%s12] sm:$0x1]
        %v1332 = vlaneseq
        %v1333 = vshrl.u32 %v1332, 7
        %v1334 = vsub.s32 0, %v1333
        %v1335 = vrot.slane %v1330, %v1334
        %v1341 = vunpack.c.l.b16 %v1326
        %v1342 = vunpack.c.l.b16 %v1327
        %v1343 = vunpack.c.l.b16 %v1328
        %v1344 = vunpack.c.l.b16 %v1329
        %v1345 = vpack.c.b16 %v1342, %v1341
        %v1346 = vpack.c.b16 %v1344, %v1343
        %v1350 = vsel %vm559, %v1325, 0
        %1352 = vmatprep.subr.bf16.mxu0 0
        %1353 = vmatpush1.bf16.msra.mxu0 0
        %1354 = vmatprep.subr.bf16.mxu0 0
        %1355 = vmatpush1.bf16.msra.mxu0 0
        %1356 = vmatprep.subr.bf16.mxu0 0
        %1357 = vmatpush1.bf16.msra.mxu0 0
        %1358 = vmatprep.subr.bf16.mxu0 0
        %1359 = vmatpush1.bf16.msra.mxu0 0
        %1360 = vmatprep.subr.bf16.mxu0 0
        %1361 = vmatpush1.bf16.msra.mxu0 0
        %1362 = vmatprep.subr.bf16.mxu0 0
        %1363 = vmatpush1.bf16.msra.mxu0 0
        %1364 = vmatprep.subr.bf16.mxu0 0
        %1365 = vmatpush1.bf16.msra.mxu0 %v1346
        %1366 = vmatprep.subr.bf16.mxu0 0
        %1367 = vmatpush1.bf16.msra.mxu0 %v1345
        %1368 = vmatprep.subr.bf16.mxu0 0
        %1369 = vmatpush2.bf16.msra.mxu0 0
        %1370 = vmatprep.subr.bf16.mxu0 0
        %1371 = vmatpush2.bf16.msra.mxu0 0
        %1372 = vmatprep.subr.bf16.mxu0 0
        %1373 = vmatpush2.bf16.msra.mxu0 0
        %1374 = vmatprep.subr.bf16.mxu0 0
        %1375 = vmatpush2.bf16.msra.mxu0 0
        %1376 = vmatprep.subr.bf16.mxu0 0
        %1377 = vmatpush2.bf16.msra.mxu0 0
        %1378 = vmatprep.subr.bf16.mxu0 0
        %1379 = vmatpush2.bf16.msra.mxu0 0
        %1380 = vmatprep.subr.bf16.mxu0 0
        %1381 = vmatpush2.bf16.msra.mxu0 0
        %1382 = vmatprep.subr.bf16.mxu0 0
        %1383 = vmatpush2.bf16.msra.mxu0 0
        %1384 = vmatprep.mubr.bf16.mxu0 0
        %1385 = vmatmul.mubr.bf16.gmra.mxu0 %v1350
        %v1386 = vpop.f32.mrf.mxu0
        %v1387 = vadd.f32 %v1335, %v1386
        %v1388 = vpop.f32.mrf.mxu0
        %v1389 = vpop.f32.mrf.mxu0
        %v1390 = vpop.f32.mrf.mxu0
        %1391 = vdwg.mxu0
        %v1392 = vmul.f32 %v1387, 1.702
        %v1393 = vxor.u32 %v1392, 2147483648
        %v1394 = vmul.f32 %v1393, 1.442695
        %v1395 = vpow.pop %v1394
        %v1396 = vadd.f32 %v1395, 1.0
        %v1397 = vrcp.pop %v1396
        %v1398 = vmul.f32 1.0, %v1397
        %v1399 = vmul.f32 %v1387, %v1398
        %v1400 = vpack.c.bf16 %v1399, %v1399
        %v1401 = vld [vmem:[%s13] sm:$0xf]
        %v1402 = vld [vmem:[%s13 + $0x4] sm:$0xf]
        %v1403 = vld [vmem:[%s13 + $0x8] sm:$0xf]
        %v1404 = vld [vmem:[%s13 + $0xc] sm:$0xf]
        %v1405 = vld [vmem:[%s13 + $0x10] sm:$0xf]
        %v1406 = vld [vmem:[%s13 + $0x14] sm:$0xf]
        %v1407 = vld [vmem:[%s13 + $0x18] sm:$0xf]
        %v1408 = vld [vmem:[%s13 + $0x1c] sm:$0xf]
        %v1409 = vld [vmem:[%s13 + $0x20] sm:$0xf]
        %v1410 = vld [vmem:[%s13 + $0x24] sm:$0xf]
        %v1411 = vld [vmem:[%s13 + $0x28] sm:$0xf]
        %v1412 = vld [vmem:[%s13 + $0x2c] sm:$0xf]
        %v1413 = vld [vmem:[%s13 + $0x30] sm:$0xf]
        %v1414 = vld [vmem:[%s13 + $0x34] sm:$0xf]
        %v1415 = vld [vmem:[%s13 + $0x38] sm:$0xf]
        %v1416 = vld [vmem:[%s13 + $0x3c] sm:$0xf]
        %v1417 = vld [vmem:[%s14] sm:$0x1]
        %v1419 = vlaneseq
        %v1420 = vshrl.u32 %v1419, 7
        %v1421 = vsub.s32 0, %v1420
        %v1422 = vrot.slane %v1417, %v1421
        %v1440 = vunpack.c.l.b16 %v1401
        %v1441 = vunpack.c.l.b16 %v1402
        %v1442 = vunpack.c.l.b16 %v1403
        %v1443 = vunpack.c.l.b16 %v1404
        %v1444 = vunpack.c.l.b16 %v1405
        %v1445 = vunpack.c.l.b16 %v1406
        %v1446 = vunpack.c.l.b16 %v1407
        %v1447 = vunpack.c.l.b16 %v1408
        %v1448 = vunpack.c.l.b16 %v1409
        %v1449 = vunpack.c.l.b16 %v1410
        %v1450 = vunpack.c.l.b16 %v1411
        %v1451 = vunpack.c.l.b16 %v1412
        %v1452 = vunpack.c.l.b16 %v1413
        %v1453 = vunpack.c.l.b16 %v1414
        %v1454 = vunpack.c.l.b16 %v1415
        %v1455 = vunpack.c.l.b16 %v1416
        %v1456 = vpack.c.b16 %v1441, %v1440
        %v1457 = vpack.c.b16 %v1443, %v1442
        %v1458 = vpack.c.b16 %v1445, %v1444
        %v1459 = vpack.c.b16 %v1447, %v1446
        %v1460 = vpack.c.b16 %v1449, %v1448
        %v1461 = vpack.c.b16 %v1451, %v1450
        %v1462 = vpack.c.b16 %v1453, %v1452
        %v1463 = vpack.c.b16 %v1455, %v1454
        %1472 = vmatprep.subr.bf16.mxu0 0
        %1473 = vmatpush1.bf16.msra.mxu0 %v1463
        %1474 = vmatprep.subr.bf16.mxu0 0
        %1475 = vmatpush1.bf16.msra.mxu0 %v1462
        %1476 = vmatprep.subr.bf16.mxu0 0
        %1477 = vmatpush1.bf16.msra.mxu0 %v1461
        %1478 = vmatprep.subr.bf16.mxu0 0
        %1479 = vmatpush1.bf16.msra.mxu0 %v1460
        %1480 = vmatprep.subr.bf16.mxu0 0
        %1481 = vmatpush1.bf16.msra.mxu0 %v1459
        %1482 = vmatprep.subr.bf16.mxu0 0
        %1483 = vmatpush1.bf16.msra.mxu0 %v1458
        %1484 = vmatprep.subr.bf16.mxu0 0
        %1485 = vmatpush1.bf16.msra.mxu0 %v1457
        %1486 = vmatprep.subr.bf16.mxu0 0
        %1487 = vmatpush1.bf16.msra.mxu0 %v1456
        %1488 = vmatprep.subr.bf16.mxu0 0
        %1489 = vmatpush2.bf16.msra.mxu0 0
        %1490 = vmatprep.subr.bf16.mxu0 0
        %1491 = vmatpush2.bf16.msra.mxu0 0
        %1492 = vmatprep.subr.bf16.mxu0 0
        %1493 = vmatpush2.bf16.msra.mxu0 0
        %1494 = vmatprep.subr.bf16.mxu0 0
        %1495 = vmatpush2.bf16.msra.mxu0 0
        %1496 = vmatprep.subr.bf16.mxu0 0
        %1497 = vmatpush2.bf16.msra.mxu0 0
        %1498 = vmatprep.subr.bf16.mxu0 0
        %1499 = vmatpush2.bf16.msra.mxu0 0
        %1500 = vmatprep.subr.bf16.mxu0 0
        %1501 = vmatpush2.bf16.msra.mxu0 0
        %1502 = vmatprep.subr.bf16.mxu0 0
        %1503 = vmatpush2.bf16.msra.mxu0 0
        %1504 = vmatprep.mubr.bf16.mxu0 0
        %1505 = vmatmul.mubr.bf16.gmra.mxu0 %v1400
        %v1506 = vpop.f32.mrf.mxu0
        %v1507 = vadd.f32 %v1422, %v1506
        %v1508 = vpop.f32.mrf.mxu0
        %v1509 = vpop.f32.mrf.mxu0
        %v1510 = vpop.f32.mrf.mxu0
        %1511 = vdwg.mxu0
        %v1512 = vadd.f32 %v1295, %v1507
        %1513 = vst.msk [vmem:[%s537] sm:$0xff] %vm559, %v1512
        %s1514 = sand.u32 %s383, 1
        %s1515 = scalar_lea.sflag [#allocation4], %s1514
        %s1516 = sand.u32 %s383, 1
        %s1517 = smul.addr %s1516, 8
        %s1518 = scalar_lea.vmem [#allocation3], %s1517
        // Predicated region
        $region81: #{tpu_custom_call.1} parent=79 // pred_check
          %p1519 = pneg %p393
        $region82: #{tpu_custom_call.1} parent=79 // pred_check_branch
          %1521 = sbr.rel (%p1519) target = $region84
        $region83: #{tpu_custom_call.1} parent=79 // pred_region
          %s1523 = ssub.s32 128, 128
          %1524 = vsyncadd %s1515, %s1523
          %s1525 = sadd.s32 %s34, %s33
          %s1526 = smul.addr %s1525, 128
          %s1527 = scalar_lea.hbm %s15, %s1526
          %s1529 = sshll.u32 %s1518, 4
          %s1530 = int_to_ptr.vmem [resolvable:$true] %s1529
          %1532 = dma.vmem_to_hbm [thread:$0]  %s1530, 128, %s1527, %s1515
        $region84: #{tpu_custom_call.1} parent=79 // pred_fallthru
          _
      $region80: #{tpu_custom_call.1} parent=5 // pred_fallthru
        _
      %p1533 = scmp.le.s32.totalorder 2, %s24
      // Predicated region
      $region85: #{tpu_custom_call.1} parent=5 // pred_check
        %p1534 = pneg %p1533
      $region86: #{tpu_custom_call.1} parent=5 // pred_check_branch
        %1536 = sbr.rel (%p1534) target = $region88
      $region87: #{tpu_custom_call.1} parent=5 // pred_region
        %s1537 = ssub.s32 %s24, 2
        // Predicated region
        $region89: #{tpu_custom_call.1} parent=87 // pred_check
          %p1538 = pneg %p399
        $region90: #{tpu_custom_call.1} parent=87 // pred_check_branch
          %1540 = sbr.rel (%p1538) target = $region92
        $region91: #{tpu_custom_call.1} parent=87 // pred_region
          %s1541 = sand.u32 %s384, 1
          %s1542 = scalar_lea.sflag [#allocation4], %s1541
          %s1543 = sand.u32 %s384, 1
          %s1544 = smul.addr %s1543, 8
          %s1545 = scalar_lea.vmem [#allocation3], %s1544
          %1546 = dma.done %s1542, 128
        $region92: #{tpu_custom_call.1} parent=87 // pred_fallthru
          _
      $region88: #{tpu_custom_call.1} parent=5 // pred_fallthru
        _
    $region6: #{tpu_custom_call.1} parent=1 // loop_footer
      %s28 = sadd.s32 1, %s24
    $region7: #{tpu_custom_call.1} parent=1 // loop_footer_branch
      %23 = sbr.rel target = $region3
    $region8: #{tpu_custom_call.1} parent=1 // loop_exit
      _
    %1547 = vsyncpa [#allocation4], 1
    %s1548 = scalar_lea.sflag [#allocation4], 1
    %1549 = vsyncpa %s1548, 1

</llo_original>
